<compile_context>
chip_gen: v5e
topology: v5e:2x2
jax: 0.10.0
libtpu: 0.0.40
codegen_flags: <defaults>
</compile_context>

<pallas_src>
import functools
import math

import jax
import jax.numpy as jnp
import numpy as np
from jax import lax
from jax.experimental import pallas as pl
from jax.experimental.pallas import tpu as pltpu


# ------------------------------ fused kernel --------------------------------

def _encoder_epilogue_kernel(
    x_ref, conv_w_ref, conv_b_ref, fc_w_ref, fc_b_ref, cmap_ref,
    out_ref, const_e_ref, pad_ref,
    *, group_size, height, width, cin_img, cout, zdim_pad,
    conv_wg, fc_wg, act_gain, cmap_scale):
  """Fused mbstd + 3x3 conv + lrelu + FC + lrelu + cmap projection.

  x_ref:       [N, H, W, C]          NHWC activations, f32
  conv_w_ref:  [9, Cout, Cin]        tap-major conv weight (channel Cin-1 = std)
  conv_b_ref:  [Cout, 1]
  fc_w_ref:    [Cout, HW, Zp]        NCHW-flatten-order FC weight, Z padded to Zp
  fc_b_ref:    [1, Zp]
  cmap_ref:    [N, Zp]               zero-padded conditioning map
  out_ref:     [N, 1]                score
  const_e_ref: [Cout, N, HW]         channel-major const_e (wrapper -> NCHW)
  pad_ref:     VMEM [N, H+2, W+2, Cin] zero-padded activation scratch
  """
  n = x_ref.shape[0]
  g = group_size
  m = n // g
  c = cin_img
  cin = c + 1
  h, w = height, width
  hw = h * w

  x = x_ref[...]                                        # [n, h, w, c]

  # ---- MinibatchStdLayer (num_channels == 1): jnp/XLU reductions only ----
  xg = x.reshape(g, m * h, w, c)                        # leading split/merge, free
  mu = jnp.mean(xg, axis=0)                             # [m*h, w, c]
  var = jnp.mean(jnp.square(xg - mu[None]), axis=0)
  sd = jnp.sqrt(var + 1e-8)                             # [m*h, w, c]
  t = jnp.sum(sd, axis=-1, keepdims=True)               # lane reduce
  t = jnp.sum(t, axis=-2, keepdims=True)                # sublane reduce -> [m*h,1,1]
  t = jnp.sum(t.reshape(m, h, 1, 1), axis=1, keepdims=True)   # [m,1,1,1]
  stat = t * (1.0 / (h * w * c))
  std_m = jnp.broadcast_to(stat, (m, h, w, 1))
  std_full = jnp.concatenate([std_m] * g, axis=0)       # sample gi*m+mi -> stat[mi]

  # ---- zero-padded activation + std channel: 1 zero fill + ONE interior store
  pad_ref[...] = jnp.zeros_like(pad_ref)
  pad_ref[:, 1:h + 1, 1:w + 1, :] = jnp.concatenate([x, std_full], axis=-1)

  # ---- 3x3 SAME conv: 9 accumulated NT matmuls, lane-dense acc [Cout, N*HW] ----
  wsc = conv_w_ref[...] * conv_wg                       # scaled once (no grid)
  acc = jnp.zeros((cout, n * hw), jnp.float32)
  for tap in range(9):
    dy, dx = tap // 3, tap % 3
    sl = pad_ref[:, dy:dy + h, dx:dx + w, :]            # [n, h, w, cin]
    sl2 = sl.reshape(n * hw, cin)                       # layout-free collapse (w==8)
    acc = acc + lax.dot_general(
        wsc[tap], sl2, (((1,), (1,)), ((), ())),        # [Cout,Cin] x [N*HW,Cin]^T
        preferred_element_type=jnp.float32)
  yt = acc + conv_b_ref[...]                            # [Cout, N*HW] + [Cout, 1]
  yt = jnp.where(yt >= 0.0, yt, 0.2 * yt) * act_gain

  # const_e channel-major; these slice-stores also realize the [N, HW] relayout
  # the FC needs (read back from VMEM below).
  for b in range(n):
    const_e_ref[:, b, :] = yt[:, b * hw:(b + 1) * hw]

  # ---- FC + lrelu*sqrt(2) + cmap projection (all full-lane, Zp = 128) ----
  # TODO(synk): nn.Dropout(p=0.5) is treated as eval-mode identity (no RNG dropout).
  hfc = jnp.zeros((n, zdim_pad), jnp.float32)
  for o in range(cout):
    hfc = hfc + jnp.dot(const_e_ref[o], fc_w_ref[o],
                        preferred_element_type=jnp.float32)   # [N,HW] x [HW,Zp]
  hfc = hfc * fc_wg + fc_b_ref[...]                     # gain on the small accumulator
  hfc = jnp.where(hfc >= 0.0, hfc, 0.2 * hfc) * act_gain
  out_ref[...] = jnp.sum(hfc * cmap_ref[...], axis=-1, keepdims=True) * cmap_scale


# --------------------------------- wrapper -----------------------------------

def encoder_epilogue_forward(x_nchw, cmap, params, *, mbstd_group_size=4):
  n, c, h, w = x_nchw.shape
  cout, cin, kh, kw = params["conv_w"].shape
  assert (kh, kw) == (3, 3) and cin == c + 1            # mbstd_num_channels == 1
  zdim, d_fc = params["fc_w"].shape
  hw = h * w
  assert d_fc == cout * hw
  if cmap.shape != (n, zdim):
    raise ValueError("cmap must be [N, z_dim] with cmap_dim == z_dim")
  g = min(mbstd_group_size, n) if mbstd_group_size is not None else n
  assert n % g == 0
  zp = ((zdim + 127) // 128) * 128                      # pad Z to full lane width

  f32 = jnp.float32
  x_nhwc = jnp.transpose(x_nchw.astype(f32), (0, 2, 3, 1))
  # Conv weight [Cout,Cin,3,3] -> [tap, Cout, Cin]  (pure layout plumbing).
  conv_w_t = jnp.transpose(params["conv_w"].astype(f32), (2, 3, 0, 1)).reshape(
      9, cout, cin)
  conv_b = params["conv_b"].astype(f32).reshape(cout, 1)
  # FC weight [Z, D] (PyTorch), D in NCHW-flatten order (o, y, x) -> [Cout, HW, Zp].
  fc_w = jnp.transpose(params["fc_w"].astype(f32), (1, 0)).reshape(cout, hw, zdim)
  fc_w = jnp.pad(fc_w, ((0, 0), (0, 0), (0, zp - zdim)))
  fc_b = jnp.pad(params["fc_b"].astype(f32).reshape(1, zdim),
                 ((0, 0), (0, zp - zdim)))
  cmap_p = jnp.pad(cmap.astype(f32), ((0, 0), (0, zp - zdim)))

  kern = functools.partial(
      _encoder_epilogue_kernel,
      group_size=g, height=h, width=w, cin_img=c, cout=cout, zdim_pad=zp,
      conv_wg=1.0 / math.sqrt(cin * 9), fc_wg=1.0 / math.sqrt(d_fc),
      act_gain=math.sqrt(2.0), cmap_scale=1.0 / math.sqrt(zdim))

  vmem = pl.BlockSpec(memory_space=pltpu.MemorySpace.VMEM)
  out, const_e_t = pl.pallas_call(
      kern,
      out_shape=(jax.ShapeDtypeStruct((n, 1), f32),
                 jax.ShapeDtypeStruct((cout, n, hw), f32)),
      in_specs=[vmem] * 6,
      out_specs=(vmem, vmem),
      scratch_shapes=[pltpu.VMEM((n, h + 2, w + 2, cin), f32)],
  )(x_nhwc, conv_w_t, conv_b, fc_w, fc_b, cmap_p)

  const_e = jnp.transpose(const_e_t, (1, 0, 2)).reshape(n, cout, h, w)   # NCHW
  return out, const_e


# ----------------------------- pure-JAX reference ----------------------------

def reference_forward(x_nchw, cmap, params, *, mbstd_group_size=4):
  n, c, h, w = x_nchw.shape
  x = x_nchw.astype(jnp.float32)
  g = min(mbstd_group_size, n)
  m = n // g
  y = x.reshape(g, m, 1, c, h, w)
  y = y - y.mean(axis=0)
  y = jnp.sqrt(jnp.square(y).mean(axis=0) + 1e-8)
  y = y.mean(axis=(2, 3, 4))                            # [m, 1]
  y = y.reshape(m, 1, 1, 1)
  y = jnp.tile(y, (g, 1, h, w))                         # [n, 1, h, w]
  xcat = jnp.concatenate([x, y], axis=1)                # [n, c+1, h, w]

  cin = c + 1
  wconv = params["conv_w"].astype(jnp.float32) * (1.0 / math.sqrt(cin * 9))
  conv = jax.lax.conv_general_dilated(
      xcat, wconv, (1, 1), "SAME",
      dimension_numbers=("NCHW", "OIHW", "NCHW"),
      precision=jax.lax.Precision.HIGHEST)
  conv = conv + params["conv_b"].astype(jnp.float32).reshape(1, -1, 1, 1)
  const_e = jnp.where(conv >= 0, conv, 0.2 * conv) * math.sqrt(2.0)

  cout = const_e.shape[1]
  d = cout * h * w
  e_flat = const_e.reshape(n, d)                        # NCHW flatten (as in PyTorch)
  fw = params["fc_w"].astype(jnp.float32) * (1.0 / math.sqrt(d))
  hfc = jnp.dot(e_flat, fw.T, precision=jax.lax.Precision.HIGHEST)
  hfc = hfc + params["fc_b"].astype(jnp.float32)
  hfc = jnp.where(hfc >= 0, hfc, 0.2 * hfc) * math.sqrt(2.0)
  out = jnp.sum(hfc * cmap.astype(jnp.float32), axis=1, keepdims=True) * (
      1.0 / math.sqrt(cmap.shape[-1]))
  return out, const_e


# ------------------------------------ main ------------------------------------

if __name__ == "__main__":
  in_channels = 4
  resolution = 8
  z_dim = 16
  cmap_dim = 16          # must equal z_dim for the (x * cmap) product
  batch = 4
  mbstd_group_size = 4
  mbstd_num_channels = 1
  cin_conv = in_channels + mbstd_num_channels
  d_fc = in_channels * resolution ** 2

  key = jax.random.PRNGKey(0)
  k1, k2, k3, k4, k5, k6 = jax.random.split(key, 6)
  params = {
      "conv_w": jax.random.normal(k1, (in_channels, cin_conv, 3, 3), jnp.float32),
      "conv_b": 0.1 * jax.random.normal(k2, (in_channels,), jnp.float32),
      "fc_w": jax.random.normal(k3, (z_dim, d_fc), jnp.float32),
      "fc_b": 0.1 * jax.random.normal(k4, (z_dim,), jnp.float32),
  }
  x = jax.random.normal(k5, (batch, in_channels, resolution, resolution),
                        jnp.float32)
  cmap = jax.random.normal(k6, (batch, cmap_dim), jnp.float32)

  fwd = jax.jit(functools.partial(encoder_epilogue_forward,
                                  mbstd_group_size=mbstd_group_size))
  out, const_e = fwd(x, cmap, params)
  jax.block_until_ready((out, const_e))

  ref_out, ref_const_e = reference_forward(
      x, cmap, params, mbstd_group_size=mbstd_group_size)
  np.testing.assert_allclose(np.asarray(out), np.asarray(ref_out),
                             rtol=1e-3, atol=1e-3)
  np.testing.assert_allclose(np.asarray(const_e), np.asarray(ref_const_e),
                             rtol=1e-3, atol=1e-3)
  print("KERNEL_OK")
</pallas_src>

<mosaic_0001>
module attributes {stable_mosaic.version = 11 : i64} {
  func.func @_encoder_epilogue_kernel(%arg0: memref<4x8x8x4xf32, #tpu.memory_space<vmem>>, %arg1: memref<9x4x5xf32, #tpu.memory_space<vmem>>, %arg2: memref<4x1xf32, #tpu.memory_space<vmem>>, %arg3: memref<4x64x128xf32, #tpu.memory_space<vmem>>, %arg4: memref<1x128xf32, #tpu.memory_space<vmem>>, %arg5: memref<4x128xf32, #tpu.memory_space<vmem>>, %arg6: memref<4x1xf32, #tpu.memory_space<vmem>>, %arg7: memref<4x4x64xf32, #tpu.memory_space<vmem>>, %arg8: memref<4x10x10x5xf32, #tpu.memory_space<vmem>>) attributes {dimension_semantics = [], scalar_prefetch = 0 : i64, scratch_operands = 1 : i64, tpu.core_type = #tpu.core_type<tc>} {
    %c0 = arith.constant 0 : index
    %c0_0 = arith.constant 0 : index
    %c0_1 = arith.constant 0 : index
    %c0_2 = arith.constant 0 : index
    %0 = vector.load %arg0[%c0, %c0_0, %c0_1, %c0_2] : memref<4x8x8x4xf32, #tpu.memory_space<vmem>>, vector<4x8x8x4xf32>
    %cst = arith.constant dense<0.000000e+00> : vector<8x8x4xf32>
    %1 = vector.multi_reduction <add>, %0, %cst [0] : vector<4x8x8x4xf32> to vector<8x8x4xf32>
    %cst_3 = arith.constant 4.000000e+00 : f32
    %2 = vector.broadcast %cst_3 : f32 to vector<8x8x4xf32>
    %3 = arith.divf %1, %2 : vector<8x8x4xf32>
    %4 = vector.shape_cast %3 : vector<8x8x4xf32> to vector<1x8x8x4xf32>
    %5 = vector.broadcast %4 : vector<1x8x8x4xf32> to vector<4x8x8x4xf32>
    %6 = arith.subf %0, %5 : vector<4x8x8x4xf32>
    %7 = arith.mulf %6, %6 : vector<4x8x8x4xf32>
    %cst_4 = arith.constant dense<0.000000e+00> : vector<8x8x4xf32>
    %8 = vector.multi_reduction <add>, %7, %cst_4 [0] : vector<4x8x8x4xf32> to vector<8x8x4xf32>
    %cst_5 = arith.constant 4.000000e+00 : f32
    %9 = vector.broadcast %cst_5 : f32 to vector<8x8x4xf32>
    %10 = arith.divf %8, %9 : vector<8x8x4xf32>
    %cst_6 = arith.constant 9.99999993E-9 : f32
    %11 = vector.broadcast %cst_6 : f32 to vector<8x8x4xf32>
    %12 = arith.addf %10, %11 : vector<8x8x4xf32>
    %13 = math.sqrt %12 : vector<8x8x4xf32>
    %cst_7 = arith.constant dense<0.000000e+00> : vector<8x8xf32>
    %14 = vector.multi_reduction <add>, %13, %cst_7 [2] : vector<8x8x4xf32> to vector<8x8xf32>
    %15 = vector.shape_cast %14 : vector<8x8xf32> to vector<8x8x1xf32>
    %cst_8 = arith.constant dense<0.000000e+00> : vector<8x1xf32>
    %16 = vector.multi_reduction <add>, %15, %cst_8 [1] : vector<8x8x1xf32> to vector<8x1xf32>
    %17 = vector.shape_cast %16 : vector<8x1xf32> to vector<8x1x1xf32>
    %18 = vector.shape_cast %17 : vector<8x1x1xf32> to vector<1x8x1x1xf32>
    %cst_9 = arith.constant dense<0.000000e+00> : vector<1x1x1xf32>
    %19 = vector.multi_reduction <add>, %18, %cst_9 [1] : vector<1x8x1x1xf32> to vector<1x1x1xf32>
    %20 = vector.shape_cast %19 : vector<1x1x1xf32> to vector<1x1x1x1xf32>
    %cst_10 = arith.constant 3.906250e-03 : f32
    %21 = vector.broadcast %cst_10 : f32 to vector<1x1x1x1xf32>
    %22 = arith.mulf %20, %21 : vector<1x1x1x1xf32>
    %23 = vector.shape_cast %22 : vector<1x1x1x1xf32> to vector<1x1x1x1xf32>
    %24 = vector.broadcast %23 : vector<1x1x1x1xf32> to vector<1x8x8x1xf32>
    %25 = tpu.concatenate %24, %24, %24, %24 in 0 : vector<1x8x8x1xf32>, vector<1x8x8x1xf32>, vector<1x8x8x1xf32>, vector<1x8x8x1xf32> -> vector<4x8x8x1xf32>
    %cst_11 = arith.constant 0.000000e+00 : f32
    %26 = vector.broadcast %cst_11 : f32 to vector<4x10x10x5xf32>
    %c0_12 = arith.constant 0 : index
    %c0_13 = arith.constant 0 : index
    %c0_14 = arith.constant 0 : index
    %c0_15 = arith.constant 0 : index
    %27 = vector.load %arg8[%c0_12, %c0_13, %c0_14, %c0_15] : memref<4x10x10x5xf32, #tpu.memory_space<vmem>>, vector<4x10x10x5xf32>
    tpu.vector_store %arg8[%c0_12, %c0_13, %c0_14, %c0_15], %26 {strides = array<i32>} : memref<4x10x10x5xf32, #tpu.memory_space<vmem>>, vector<4x10x10x5xf32>,
    %28 = tpu.concatenate %0, %25 in 3 : vector<4x8x8x4xf32>, vector<4x8x8x1xf32> -> vector<4x8x8x5xf32>
    %c0_16 = arith.constant 0 : index
    %c1 = arith.constant 1 : index
    %c1_17 = arith.constant 1 : index
    %c0_18 = arith.constant 0 : index
    %29 = vector.load %arg8[%c0_16, %c1, %c1_17, %c0_18] : memref<4x10x10x5xf32, #tpu.memory_space<vmem>>, vector<4x8x8x5xf32>
    tpu.vector_store %arg8[%c0_16, %c1, %c1_17, %c0_18], %28 {strides = array<i32>} : memref<4x10x10x5xf32, #tpu.memory_space<vmem>>, vector<4x8x8x5xf32>,
    %c0_19 = arith.constant 0 : index
    %c0_20 = arith.constant 0 : index
    %c0_21 = arith.constant 0 : index
    %30 = vector.load %arg1[%c0_19, %c0_20, %c0_21] : memref<9x4x5xf32, #tpu.memory_space<vmem>>, vector<9x4x5xf32>
    %cst_22 = arith.constant 0.149071202 : f32
    %31 = vector.broadcast %cst_22 : f32 to vector<9x4x5xf32>
    %32 = arith.mulf %30, %31 : vector<9x4x5xf32>
    %cst_23 = arith.constant 0.000000e+00 : f32
    %33 = vector.broadcast %cst_23 : f32 to vector<4x256xf32>
    %c0_24 = arith.constant 0 : index
    %c0_25 = arith.constant 0 : index
    %c0_26 = arith.constant 0 : index
    %c0_27 = arith.constant 0 : index
    %34 = vector.load %arg8[%c0_24, %c0_25, %c0_26, %c0_27] : memref<4x10x10x5xf32, #tpu.memory_space<vmem>>, vector<4x8x8x5xf32>
    %35 = vector.shape_cast %34 : vector<4x8x8x5xf32> to vector<256x5xf32>
    %36 = vector.extract_strided_slice %32 {offsets = [0, 0, 0], sizes = [1, 4, 5], strides = [1, 1, 1]} : vector<9x4x5xf32> to vector<1x4x5xf32>
    %37 = vector.shape_cast %36 : vector<1x4x5xf32> to vector<4x5xf32>
    %cst_28 = arith.constant dense<0.000000e+00> : vector<4x256xf32>
    %38 = tpu.matmul %37, %35, %cst_28 {dimension_numbers = #tpu.dot_dimension_numbers<[1], [1], [0], [0], [0, 0, 1, 0], [], []>} : vector<4x5xf32>, vector<256x5xf32>, vector<4x256xf32> -> vector<4x256xf32>
    %39 = arith.addf %33, %38 : vector<4x256xf32>
    %c0_29 = arith.constant 0 : index
    %c0_30 = arith.constant 0 : index
    %c1_31 = arith.constant 1 : index
    %c0_32 = arith.constant 0 : index
    %40 = vector.load %arg8[%c0_29, %c0_30, %c1_31, %c0_32] : memref<4x10x10x5xf32, #tpu.memory_space<vmem>>, vector<4x8x8x5xf32>
    %41 = vector.shape_cast %40 : vector<4x8x8x5xf32> to vector<256x5xf32>
    %42 = vector.extract_strided_slice %32 {offsets = [1, 0, 0], sizes = [1, 4, 5], strides = [1, 1, 1]} : vector<9x4x5xf32> to vector<1x4x5xf32>
    %43 = vector.shape_cast %42 : vector<1x4x5xf32> to vector<4x5xf32>
    %cst_33 = arith.constant dense<0.000000e+00> : vector<4x256xf32>
    %44 = tpu.matmul %43, %41, %cst_33 {dimension_numbers = #tpu.dot_dimension_numbers<[1], [1], [0], [0], [0, 0, 1, 0], [], []>} : vector<4x5xf32>, vector<256x5xf32>, vector<4x256xf32> -> vector<4x256xf32>
    %45 = arith.addf %39, %44 : vector<4x256xf32>
    %c0_34 = arith.constant 0 : index
    %c0_35 = arith.constant 0 : index
    %c2 = arith.constant 2 : index
    %c0_36 = arith.constant 0 : index
    %46 = vector.load %arg8[%c0_34, %c0_35, %c2, %c0_36] : memref<4x10x10x5xf32, #tpu.memory_space<vmem>>, vector<4x8x8x5xf32>
    %47 = vector.shape_cast %46 : vector<4x8x8x5xf32> to vector<256x5xf32>
    %48 = vector.extract_strided_slice %32 {offsets = [2, 0, 0], sizes = [1, 4, 5], strides = [1, 1, 1]} : vector<9x4x5xf32> to vector<1x4x5xf32>
    %49 = vector.shape_cast %48 : vector<1x4x5xf32> to vector<4x5xf32>
    %cst_37 = arith.constant dense<0.000000e+00> : vector<4x256xf32>
    %50 = tpu.matmul %49, %47, %cst_37 {dimension_numbers = #tpu.dot_dimension_numbers<[1], [1], [0], [0], [0, 0, 1, 0], [], []>} : vector<4x5xf32>, vector<256x5xf32>, vector<4x256xf32> -> vector<4x256xf32>
    %51 = arith.addf %45, %50 : vector<4x256xf32>
    %c0_38 = arith.constant 0 : index
    %c1_39 = arith.constant 1 : index
    %c0_40 = arith.constant 0 : index
    %c0_41 = arith.constant 0 : index
    %52 = vector.load %arg8[%c0_38, %c1_39, %c0_40, %c0_41] : memref<4x10x10x5xf32, #tpu.memory_space<vmem>>, vector<4x8x8x5xf32>
    %53 = vector.shape_cast %52 : vector<4x8x8x5xf32> to vector<256x5xf32>
    %54 = vector.extract_strided_slice %32 {offsets = [3, 0, 0], sizes = [1, 4, 5], strides = [1, 1, 1]} : vector<9x4x5xf32> to vector<1x4x5xf32>
    %55 = vector.shape_cast %54 : vector<1x4x5xf32> to vector<4x5xf32>
    %cst_42 = arith.constant dense<0.000000e+00> : vector<4x256xf32>
    %56 = tpu.matmul %55, %53, %cst_42 {dimension_numbers = #tpu.dot_dimension_numbers<[1], [1], [0], [0], [0, 0, 1, 0], [], []>} : vector<4x5xf32>, vector<256x5xf32>, vector<4x256xf32> -> vector<4x256xf32>
    %57 = arith.addf %51, %56 : vector<4x256xf32>
    %c0_43 = arith.constant 0 : index
    %c1_44 = arith.constant 1 : index
    %c1_45 = arith.constant 1 : index
    %c0_46 = arith.constant 0 : index
    %58 = vector.load %arg8[%c0_43, %c1_44, %c1_45, %c0_46] : memref<4x10x10x5xf32, #tpu.memory_space<vmem>>, vector<4x8x8x5xf32>
    %59 = vector.shape_cast %58 : vector<4x8x8x5xf32> to vector<256x5xf32>
    %60 = vector.extract_strided_slice %32 {offsets = [4, 0, 0], sizes = [1, 4, 5], strides = [1, 1, 1]} : vector<9x4x5xf32> to vector<1x4x5xf32>
    %61 = vector.shape_cast %60 : vector<1x4x5xf32> to vector<4x5xf32>
    %cst_47 = arith.constant dense<0.000000e+00> : vector<4x256xf32>
    %62 = tpu.matmul %61, %59, %cst_47 {dimension_numbers = #tpu.dot_dimension_numbers<[1], [1], [0], [0], [0, 0, 1, 0], [], []>} : vector<4x5xf32>, vector<256x5xf32>, vector<4x256xf32> -> vector<4x256xf32>
    %63 = arith.addf %57, %62 : vector<4x256xf32>
    %c0_48 = arith.constant 0 : index
    %c1_49 = arith.constant 1 : index
    %c2_50 = arith.constant 2 : index
    %c0_51 = arith.constant 0 : index
    %64 = vector.load %arg8[%c0_48, %c1_49, %c2_50, %c0_51] : memref<4x10x10x5xf32, #tpu.memory_space<vmem>>, vector<4x8x8x5xf32>
    %65 = vector.shape_cast %64 : vector<4x8x8x5xf32> to vector<256x5xf32>
    %66 = vector.extract_strided_slice %32 {offsets = [5, 0, 0], sizes = [1, 4, 5], strides = [1, 1, 1]} : vector<9x4x5xf32> to vector<1x4x5xf32>
    %67 = vector.shape_cast %66 : vector<1x4x5xf32> to vector<4x5xf32>
    %cst_52 = arith.constant dense<0.000000e+00> : vector<4x256xf32>
    %68 = tpu.matmul %67, %65, %cst_52 {dimension_numbers = #tpu.dot_dimension_numbers<[1], [1], [0], [0], [0, 0, 1, 0], [], []>} : vector<4x5xf32>, vector<256x5xf32>, vector<4x256xf32> -> vector<4x256xf32>
    %69 = arith.addf %63, %68 : vector<4x256xf32>
    %c0_53 = arith.constant 0 : index
    %c2_54 = arith.constant 2 : index
    %c0_55 = arith.constant 0 : index
    %c0_56 = arith.constant 0 : index
    %70 = vector.load %arg8[%c0_53, %c2_54, %c0_55, %c0_56] : memref<4x10x10x5xf32, #tpu.memory_space<vmem>>, vector<4x8x8x5xf32>
    %71 = vector.shape_cast %70 : vector<4x8x8x5xf32> to vector<256x5xf32>
    %72 = vector.extract_strided_slice %32 {offsets = [6, 0, 0], sizes = [1, 4, 5], strides = [1, 1, 1]} : vector<9x4x5xf32> to vector<1x4x5xf32>
    %73 = vector.shape_cast %72 : vector<1x4x5xf32> to vector<4x5xf32>
    %cst_57 = arith.constant dense<0.000000e+00> : vector<4x256xf32>
    %74 = tpu.matmul %73, %71, %cst_57 {dimension_numbers = #tpu.dot_dimension_numbers<[1], [1], [0], [0], [0, 0, 1, 0], [], []>} : vector<4x5xf32>, vector<256x5xf32>, vector<4x256xf32> -> vector<4x256xf32>
    %75 = arith.addf %69, %74 : vector<4x256xf32>
    %c0_58 = arith.constant 0 : index
    %c2_59 = arith.constant 2 : index
    %c1_60 = arith.constant 1 : index
    %c0_61 = arith.constant 0 : index
    %76 = vector.load %arg8[%c0_58, %c2_59, %c1_60, %c0_61] : memref<4x10x10x5xf32, #tpu.memory_space<vmem>>, vector<4x8x8x5xf32>
    %77 = vector.shape_cast %76 : vector<4x8x8x5xf32> to vector<256x5xf32>
    %78 = vector.extract_strided_slice %32 {offsets = [7, 0, 0], sizes = [1, 4, 5], strides = [1, 1, 1]} : vector<9x4x5xf32> to vector<1x4x5xf32>
    %79 = vector.shape_cast %78 : vector<1x4x5xf32> to vector<4x5xf32>
    %cst_62 = arith.constant dense<0.000000e+00> : vector<4x256xf32>
    %80 = tpu.matmul %79, %77, %cst_62 {dimension_numbers = #tpu.dot_dimension_numbers<[1], [1], [0], [0], [0, 0, 1, 0], [], []>} : vector<4x5xf32>, vector<256x5xf32>, vector<4x256xf32> -> vector<4x256xf32>
    %81 = arith.addf %75, %80 : vector<4x256xf32>
    %c0_63 = arith.constant 0 : index
    %c2_64 = arith.constant 2 : index
    %c2_65 = arith.constant 2 : index
    %c0_66 = arith.constant 0 : index
    %82 = vector.load %arg8[%c0_63, %c2_64, %c2_65, %c0_66] : memref<4x10x10x5xf32, #tpu.memory_space<vmem>>, vector<4x8x8x5xf32>
    %83 = vector.shape_cast %82 : vector<4x8x8x5xf32> to vector<256x5xf32>
    %84 = vector.extract_strided_slice %32 {offsets = [8, 0, 0], sizes = [1, 4, 5], strides = [1, 1, 1]} : vector<9x4x5xf32> to vector<1x4x5xf32>
    %85 = vector.shape_cast %84 : vector<1x4x5xf32> to vector<4x5xf32>
    %cst_67 = arith.constant dense<0.000000e+00> : vector<4x256xf32>
    %86 = tpu.matmul %85, %83, %cst_67 {dimension_numbers = #tpu.dot_dimension_numbers<[1], [1], [0], [0], [0, 0, 1, 0], [], []>} : vector<4x5xf32>, vector<256x5xf32>, vector<4x256xf32> -> vector<4x256xf32>
    %87 = arith.addf %81, %86 : vector<4x256xf32>
    %c0_68 = arith.constant 0 : index
    %c0_69 = arith.constant 0 : index
    %88 = vector.load %arg2[%c0_68, %c0_69] : memref<4x1xf32, #tpu.memory_space<vmem>>, vector<4x1xf32>
    %89 = vector.broadcast %88 : vector<4x1xf32> to vector<4x256xf32>
    %90 = arith.addf %87, %89 : vector<4x256xf32>
    %cst_70 = arith.constant 0.000000e+00 : f32
    %91 = vector.broadcast %cst_70 : f32 to vector<4x256xf32>
    %92 = arith.cmpf oge, %90, %91 : vector<4x256xf32>
    %cst_71 = arith.constant 2.000000e-01 : f32
    %93 = vector.broadcast %cst_71 : f32 to vector<4x256xf32>
    %94 = arith.mulf %93, %90 : vector<4x256xf32>
    %95 = arith.select %92, %90, %94 : vector<4x256xi1>, vector<4x256xf32>
    %cst_72 = arith.constant 1.41421354 : f32
    %96 = vector.broadcast %cst_72 : f32 to vector<4x256xf32>
    %97 = arith.mulf %95, %96 : vector<4x256xf32>
    %98 = vector.extract_strided_slice %97 {offsets = [0, 0], sizes = [4, 64], strides = [1, 1]} : vector<4x256xf32> to vector<4x64xf32>
    %c0_73 = arith.constant 0 : index
    %c0_74 = arith.constant 0 : index
    %c0_75 = arith.constant 0 : index
    %99 = vector.load %arg7[%c0_73, %c0_74, %c0_75] : memref<4x4x64xf32, #tpu.memory_space<vmem>>, vector<4x1x64xf32>
    %100 = vector.shape_cast %99 : vector<4x1x64xf32> to vector<4x64xf32>
    %101 = vector.shape_cast %98 : vector<4x64xf32> to vector<4x1x64xf32>
    tpu.vector_store %arg7[%c0_73, %c0_74, %c0_75], %101 {strides = array<i32>} : memref<4x4x64xf32, #tpu.memory_space<vmem>>, vector<4x1x64xf32>,
    %102 = vector.extract_strided_slice %97 {offsets = [0, 64], sizes = [4, 64], strides = [1, 1]} : vector<4x256xf32> to vector<4x64xf32>
    %c0_76 = arith.constant 0 : index
    %c1_77 = arith.constant 1 : index
    %c0_78 = arith.constant 0 : index
    %103 = vector.load %arg7[%c0_76, %c1_77, %c0_78] : memref<4x4x64xf32, #tpu.memory_space<vmem>>, vector<4x1x64xf32>
    %104 = vector.shape_cast %103 : vector<4x1x64xf32> to vector<4x64xf32>
    %105 = vector.shape_cast %102 : vector<4x64xf32> to vector<4x1x64xf32>
    tpu.vector_store %arg7[%c0_76, %c1_77, %c0_78], %105 {strides = array<i32>} : memref<4x4x64xf32, #tpu.memory_space<vmem>>, vector<4x1x64xf32>,
    %106 = vector.extract_strided_slice %97 {offsets = [0, 128], sizes = [4, 64], strides = [1, 1]} : vector<4x256xf32> to vector<4x64xf32>
    %c0_79 = arith.constant 0 : index
    %c2_80 = arith.constant 2 : index
    %c0_81 = arith.constant 0 : index
    %107 = vector.load %arg7[%c0_79, %c2_80, %c0_81] : memref<4x4x64xf32, #tpu.memory_space<vmem>>, vector<4x1x64xf32>
    %108 = vector.shape_cast %107 : vector<4x1x64xf32> to vector<4x64xf32>
    %109 = vector.shape_cast %106 : vector<4x64xf32> to vector<4x1x64xf32>
    tpu.vector_store %arg7[%c0_79, %c2_80, %c0_81], %109 {strides = array<i32>} : memref<4x4x64xf32, #tpu.memory_space<vmem>>, vector<4x1x64xf32>,
    %110 = vector.extract_strided_slice %97 {offsets = [0, 192], sizes = [4, 64], strides = [1, 1]} : vector<4x256xf32> to vector<4x64xf32>
    %c0_82 = arith.constant 0 : index
    %c3 = arith.constant 3 : index
    %c0_83 = arith.constant 0 : index
    %111 = vector.load %arg7[%c0_82, %c3, %c0_83] : memref<4x4x64xf32, #tpu.memory_space<vmem>>, vector<4x1x64xf32>
    %112 = vector.shape_cast %111 : vector<4x1x64xf32> to vector<4x64xf32>
    %113 = vector.shape_cast %110 : vector<4x64xf32> to vector<4x1x64xf32>
    tpu.vector_store %arg7[%c0_82, %c3, %c0_83], %113 {strides = array<i32>} : memref<4x4x64xf32, #tpu.memory_space<vmem>>, vector<4x1x64xf32>,
    %cst_84 = arith.constant 0.000000e+00 : f32
    %114 = vector.broadcast %cst_84 : f32 to vector<4x128xf32>
    %c0_85 = arith.constant 0 : index
    %c0_86 = arith.constant 0 : index
    %c0_87 = arith.constant 0 : index
    %115 = vector.load %arg7[%c0_85, %c0_86, %c0_87] : memref<4x4x64xf32, #tpu.memory_space<vmem>>, vector<1x4x64xf32>
    %116 = vector.shape_cast %115 : vector<1x4x64xf32> to vector<4x64xf32>
    %c0_88 = arith.constant 0 : index
    %c0_89 = arith.constant 0 : index
    %c0_90 = arith.constant 0 : index
    %117 = vector.load %arg3[%c0_88, %c0_89, %c0_90] : memref<4x64x128xf32, #tpu.memory_space<vmem>>, vector<1x64x128xf32>
    %118 = vector.shape_cast %117 : vector<1x64x128xf32> to vector<64x128xf32>
    %cst_91 = arith.constant dense<0.000000e+00> : vector<4x128xf32>
    %119 = tpu.matmul %116, %118, %cst_91 {dimension_numbers = #tpu.dot_dimension_numbers<[1], [0], [0], [1], [0, 0, 1, 1], [], []>} : vector<4x64xf32>, vector<64x128xf32>, vector<4x128xf32> -> vector<4x128xf32>
    %120 = arith.addf %114, %119 : vector<4x128xf32>
    %c1_92 = arith.constant 1 : index
    %c0_93 = arith.constant 0 : index
    %c0_94 = arith.constant 0 : index
    %121 = vector.load %arg7[%c1_92, %c0_93, %c0_94] : memref<4x4x64xf32, #tpu.memory_space<vmem>>, vector<1x4x64xf32>
    %122 = vector.shape_cast %121 : vector<1x4x64xf32> to vector<4x64xf32>
    %c1_95 = arith.constant 1 : index
    %c0_96 = arith.constant 0 : index
    %c0_97 = arith.constant 0 : index
    %123 = vector.load %arg3[%c1_95, %c0_96, %c0_97] : memref<4x64x128xf32, #tpu.memory_space<vmem>>, vector<1x64x128xf32>
    %124 = vector.shape_cast %123 : vector<1x64x128xf32> to vector<64x128xf32>
    %cst_98 = arith.constant dense<0.000000e+00> : vector<4x128xf32>
    %125 = tpu.matmul %122, %124, %cst_98 {dimension_numbers = #tpu.dot_dimension_numbers<[1], [0], [0], [1], [0, 0, 1, 1], [], []>} : vector<4x64xf32>, vector<64x128xf32>, vector<4x128xf32> -> vector<4x128xf32>
    %126 = arith.addf %120, %125 : vector<4x128xf32>
    %c2_99 = arith.constant 2 : index
    %c0_100 = arith.constant 0 : index
    %c0_101 = arith.constant 0 : index
    %127 = vector.load %arg7[%c2_99, %c0_100, %c0_101] : memref<4x4x64xf32, #tpu.memory_space<vmem>>, vector<1x4x64xf32>
    %128 = vector.shape_cast %127 : vector<1x4x64xf32> to vector<4x64xf32>
    %c2_102 = arith.constant 2 : index
    %c0_103 = arith.constant 0 : index
    %c0_104 = arith.constant 0 : index
    %129 = vector.load %arg3[%c2_102, %c0_103, %c0_104] : memref<4x64x128xf32, #tpu.memory_space<vmem>>, vector<1x64x128xf32>
    %130 = vector.shape_cast %129 : vector<1x64x128xf32> to vector<64x128xf32>
    %cst_105 = arith.constant dense<0.000000e+00> : vector<4x128xf32>
    %131 = tpu.matmul %128, %130, %cst_105 {dimension_numbers = #tpu.dot_dimension_numbers<[1], [0], [0], [1], [0, 0, 1, 1], [], []>} : vector<4x64xf32>, vector<64x128xf32>, vector<4x128xf32> -> vector<4x128xf32>
    %132 = arith.addf %126, %131 : vector<4x128xf32>
    %c3_106 = arith.constant 3 : index
    %c0_107 = arith.constant 0 : index
    %c0_108 = arith.constant 0 : index
    %133 = vector.load %arg7[%c3_106, %c0_107, %c0_108] : memref<4x4x64xf32, #tpu.memory_space<vmem>>, vector<1x4x64xf32>
    %134 = vector.shape_cast %133 : vector<1x4x64xf32> to vector<4x64xf32>
    %c3_109 = arith.constant 3 : index
    %c0_110 = arith.constant 0 : index
    %c0_111 = arith.constant 0 : index
    %135 = vector.load %arg3[%c3_109, %c0_110, %c0_111] : memref<4x64x128xf32, #tpu.memory_space<vmem>>, vector<1x64x128xf32>
    %136 = vector.shape_cast %135 : vector<1x64x128xf32> to vector<64x128xf32>
    %cst_112 = arith.constant dense<0.000000e+00> : vector<4x128xf32>
    %137 = tpu.matmul %134, %136, %cst_112 {dimension_numbers = #tpu.dot_dimension_numbers<[1], [0], [0], [1], [0, 0, 1, 1], [], []>} : vector<4x64xf32>, vector<64x128xf32>, vector<4x128xf32> -> vector<4x128xf32>
    %138 = arith.addf %132, %137 : vector<4x128xf32>
    %cst_113 = arith.constant 6.250000e-02 : f32
    %139 = vector.broadcast %cst_113 : f32 to vector<4x128xf32>
    %140 = arith.mulf %138, %139 : vector<4x128xf32>
    %c0_114 = arith.constant 0 : index
    %c0_115 = arith.constant 0 : index
    %141 = vector.load %arg4[%c0_114, %c0_115] : memref<1x128xf32, #tpu.memory_space<vmem>>, vector<1x128xf32>
    %142 = vector.broadcast %141 : vector<1x128xf32> to vector<4x128xf32>
    %143 = arith.addf %140, %142 : vector<4x128xf32>
    %cst_116 = arith.constant 0.000000e+00 : f32
    %144 = vector.broadcast %cst_116 : f32 to vector<4x128xf32>
    %145 = arith.cmpf oge, %143, %144 : vector<4x128xf32>
    %cst_117 = arith.constant 2.000000e-01 : f32
    %146 = vector.broadcast %cst_117 : f32 to vector<4x128xf32>
    %147 = arith.mulf %146, %143 : vector<4x128xf32>
    %148 = arith.select %145, %143, %147 : vector<4x128xi1>, vector<4x128xf32>
    %cst_118 = arith.constant 1.41421354 : f32
    %149 = vector.broadcast %cst_118 : f32 to vector<4x128xf32>
    %150 = arith.mulf %148, %149 : vector<4x128xf32>
    %c0_119 = arith.constant 0 : index
    %c0_120 = arith.constant 0 : index
    %151 = vector.load %arg5[%c0_119, %c0_120] : memref<4x128xf32, #tpu.memory_space<vmem>>, vector<4x128xf32>
    %152 = arith.mulf %150, %151 : vector<4x128xf32>
    %cst_121 = arith.constant dense<0.000000e+00> : vector<4xf32>
    %153 = vector.multi_reduction <add>, %152, %cst_121 [1] : vector<4x128xf32> to vector<4xf32>
    %154 = vector.shape_cast %153 : vector<4xf32> to vector<4x1xf32>
    %cst_122 = arith.constant 2.500000e-01 : f32
    %155 = vector.broadcast %cst_122 : f32 to vector<4x1xf32>
    %156 = arith.mulf %154, %155 : vector<4x1xf32>
    %c0_123 = arith.constant 0 : index
    %c0_124 = arith.constant 0 : index
    %157 = vector.load %arg6[%c0_123, %c0_124] : memref<4x1xf32, #tpu.memory_space<vmem>>, vector<4x1xf32>
    tpu.vector_store %arg6[%c0_123, %c0_124], %156 {strides = array<i32>} : memref<4x1xf32, #tpu.memory_space<vmem>>, vector<4x1xf32>,
    return
  }
}

</mosaic_0001>

<llo_original>
// kernel: encoder_epilogue_forward.1
$region0: #{encoder_epilogue_forward.1}
  #allocation0 [shape = 'u32[]', space=smem, size = 0x4, offset = 0x4, fixed_abs, tag = 'smem constant byte address 0x4 - core index']
  #allocation1 [shape = 'u32[72,128]{1,0:T(1,128)}', space=vmem, size = 0x9000, scoped, tag = 'internal scratch']
  #allocation2 [shape = 'f32[4,10,10,5]{3,2,1,0:T(8,128)}', space=vmem, size = 0x50000, scoped, tag = 'scratch operand']
  %s0 = inlined_call_operand.vmem [shape: f32[4,8,8,4], index: 0, kind: input, shape index: {}]
  %s1 = inlined_call_operand.vmem [shape: f32[9,4,5], index: 1, kind: input, shape index: {}]
  %s2 = inlined_call_operand.vmem [shape: f32[4,1], index: 2, kind: input, shape index: {}]
  %s3 = inlined_call_operand.vmem [shape: f32[4,64,128], index: 3, kind: input, shape index: {}]
  %s4 = inlined_call_operand.vmem [shape: f32[1,128], index: 4, kind: input, shape index: {}]
  %s5 = inlined_call_operand.vmem [shape: f32[4,128], index: 5, kind: input, shape index: {}]
  %s6 = inlined_call_operand.vmem [shape: f32[4,1], index: 6, kind: output, shape index: {0}]
  %s7 = inlined_call_operand.vmem [shape: f32[4,4,64], index: 7, kind: output, shape index: {1}]
  %8 = xla_tuple %s6, %s7
  %s9 = sld [smem:[#allocation0]]
  $region42: #{encoder_epilogue_forward.1} parent=0
    _
  %s11 = ssub.s32 1, %s9
  %s12 = scalar_select 0, %s11, %s9
  // Predicated region
  $region2: #{encoder_epilogue_forward.1} parent=0 // pred_check
    _
  $region3: #{encoder_epilogue_forward.1} parent=0 // pred_check_branch
    %14 = sbr.rel (0) target = $region5
  $region4: #{encoder_epilogue_forward.1} parent=0 // pred_region
    _
  $region5: #{encoder_epilogue_forward.1} parent=0 // pred_fallthru
    _
  // Predicated region
  $region6: #{encoder_epilogue_forward.1} parent=0 // pred_check
    _
  $region7: #{encoder_epilogue_forward.1} parent=0 // pred_check_branch
    %16 = sbr.rel (0) target = $region9
  $region8: #{encoder_epilogue_forward.1} parent=0 // pred_region
    _
  $region9: #{encoder_epilogue_forward.1} parent=0 // pred_fallthru
    _
  // Predicated region
  $region10: #{encoder_epilogue_forward.1} parent=0 // pred_check
    _
  $region11: #{encoder_epilogue_forward.1} parent=0 // pred_check_branch
    %18 = sbr.rel (0) target = $region13
  $region12: #{encoder_epilogue_forward.1} parent=0 // pred_region
    _
  $region13: #{encoder_epilogue_forward.1} parent=0 // pred_fallthru
    _
  // Predicated region
  $region14: #{encoder_epilogue_forward.1} parent=0 // pred_check
    _
  $region15: #{encoder_epilogue_forward.1} parent=0 // pred_check_branch
    %20 = sbr.rel (0) target = $region17
  $region16: #{encoder_epilogue_forward.1} parent=0 // pred_region
    _
  $region17: #{encoder_epilogue_forward.1} parent=0 // pred_fallthru
    _
  // Predicated region
  $region18: #{encoder_epilogue_forward.1} parent=0 // pred_check
    _
  $region19: #{encoder_epilogue_forward.1} parent=0 // pred_check_branch
    %22 = sbr.rel (0) target = $region21
  $region20: #{encoder_epilogue_forward.1} parent=0 // pred_region
    _
  $region21: #{encoder_epilogue_forward.1} parent=0 // pred_fallthru
    _
  // Predicated region
  $region22: #{encoder_epilogue_forward.1} parent=0 // pred_check
    _
  $region23: #{encoder_epilogue_forward.1} parent=0 // pred_check_branch
    %24 = sbr.rel (0) target = $region25
  $region24: #{encoder_epilogue_forward.1} parent=0 // pred_region
    _
  $region25: #{encoder_epilogue_forward.1} parent=0 // pred_fallthru
    _
  %v25 = vld [vmem:[%s0] sm:$0xff]
  %v26 = vld [vmem:[%s0 + $0x8] sm:$0xff]
  %v27 = vld [vmem:[%s0 + $0x10] sm:$0xff]
  %v28 = vld [vmem:[%s0 + $0x18] sm:$0xff]
  %v29 = vld [vmem:[%s0 + $0x20] sm:$0xff]
  %v30 = vld [vmem:[%s0 + $0x28] sm:$0xff]
  %v31 = vld [vmem:[%s0 + $0x30] sm:$0xff]
  %v32 = vld [vmem:[%s0 + $0x38] sm:$0xff]
  %v33 = vld [vmem:[%s0 + $0x40] sm:$0xff]
  %v34 = vld [vmem:[%s0 + $0x48] sm:$0xff]
  %v35 = vld [vmem:[%s0 + $0x50] sm:$0xff]
  %v36 = vld [vmem:[%s0 + $0x58] sm:$0xff]
  %v37 = vld [vmem:[%s0 + $0x60] sm:$0xff]
  %v38 = vld [vmem:[%s0 + $0x68] sm:$0xff]
  %v39 = vld [vmem:[%s0 + $0x70] sm:$0xff]
  %v40 = vld [vmem:[%s0 + $0x78] sm:$0xff]
  %v41 = vld [vmem:[%s0 + $0x80] sm:$0xff]
  %v42 = vld [vmem:[%s0 + $0x88] sm:$0xff]
  %v43 = vld [vmem:[%s0 + $0x90] sm:$0xff]
  %v44 = vld [vmem:[%s0 + $0x98] sm:$0xff]
  %v45 = vld [vmem:[%s0 + $0xa0] sm:$0xff]
  %v46 = vld [vmem:[%s0 + $0xa8] sm:$0xff]
  %v47 = vld [vmem:[%s0 + $0xb0] sm:$0xff]
  %v48 = vld [vmem:[%s0 + $0xb8] sm:$0xff]
  %v49 = vld [vmem:[%s0 + $0xc0] sm:$0xff]
  %v50 = vld [vmem:[%s0 + $0xc8] sm:$0xff]
  %v51 = vld [vmem:[%s0 + $0xd0] sm:$0xff]
  %v52 = vld [vmem:[%s0 + $0xd8] sm:$0xff]
  %v53 = vld [vmem:[%s0 + $0xe0] sm:$0xff]
  %v54 = vld [vmem:[%s0 + $0xe8] sm:$0xff]
  %v55 = vld [vmem:[%s0 + $0xf0] sm:$0xff]
  %v56 = vld [vmem:[%s0 + $0xf8] sm:$0xff]
  %vm57 = vcmask 31744
  %v58 = vsel %vm57, %v25, 0.0
  %v59 = vsel %vm57, %v33, 0.0
  %v60 = vadd.f32 %v58, %v59
  %v61 = vsel %vm57, %v41, 0.0
  %v62 = vadd.f32 %v60, %v61
  %v63 = vsel %vm57, %v49, 0.0
  %v64 = vadd.f32 %v62, %v63
  %v65 = vsel %vm57, %v26, 0.0
  %v66 = vsel %vm57, %v34, 0.0
  %v67 = vadd.f32 %v65, %v66
  %v68 = vsel %vm57, %v42, 0.0
  %v69 = vadd.f32 %v67, %v68
  %v70 = vsel %vm57, %v50, 0.0
  %v71 = vadd.f32 %v69, %v70
  %v72 = vsel %vm57, %v27, 0.0
  %v73 = vsel %vm57, %v35, 0.0
  %v74 = vadd.f32 %v72, %v73
  %v75 = vsel %vm57, %v43, 0.0
  %v76 = vadd.f32 %v74, %v75
  %v77 = vsel %vm57, %v51, 0.0
  %v78 = vadd.f32 %v76, %v77
  %v79 = vsel %vm57, %v28, 0.0
  %v80 = vsel %vm57, %v36, 0.0
  %v81 = vadd.f32 %v79, %v80
  %v82 = vsel %vm57, %v44, 0.0
  %v83 = vadd.f32 %v81, %v82
  %v84 = vsel %vm57, %v52, 0.0
  %v85 = vadd.f32 %v83, %v84
  %v86 = vsel %vm57, %v29, 0.0
  %v87 = vsel %vm57, %v37, 0.0
  %v88 = vadd.f32 %v86, %v87
  %v89 = vsel %vm57, %v45, 0.0
  %v90 = vadd.f32 %v88, %v89
  %v91 = vsel %vm57, %v53, 0.0
  %v92 = vadd.f32 %v90, %v91
  %v93 = vsel %vm57, %v30, 0.0
  %v94 = vsel %vm57, %v38, 0.0
  %v95 = vadd.f32 %v93, %v94
  %v96 = vsel %vm57, %v46, 0.0
  %v97 = vadd.f32 %v95, %v96
  %v98 = vsel %vm57, %v54, 0.0
  %v99 = vadd.f32 %v97, %v98
  %v100 = vsel %vm57, %v31, 0.0
  %v101 = vsel %vm57, %v39, 0.0
  %v102 = vadd.f32 %v100, %v101
  %v103 = vsel %vm57, %v47, 0.0
  %v104 = vadd.f32 %v102, %v103
  %v105 = vsel %vm57, %v55, 0.0
  %v106 = vadd.f32 %v104, %v105
  %v107 = vsel %vm57, %v32, 0.0
  %v108 = vsel %vm57, %v40, 0.0
  %v109 = vadd.f32 %v107, %v108
  %v110 = vsel %vm57, %v48, 0.0
  %v111 = vadd.f32 %v109, %v110
  %v112 = vsel %vm57, %v56, 0.0
  %v113 = vadd.f32 %v111, %v112
  %v114 = vrcp.pop 4.0
  %v115 = vmul.f32 4.0, %v114
  %v116 = vsub.f32 1.0, %v115
  %v117 = vmul.f32 %v114, %v116
  %v118 = vadd.f32 %v114, %v117
  %vm119 = vweird.f32 %v114
  %v120 = vsel %vm119, %v114, %v118
  %v121 = vmul.f32 %v64, %v120
  %v122 = vmul.f32 %v71, %v120
  %v123 = vmul.f32 %v78, %v120
  %v124 = vmul.f32 %v85, %v120
  %v125 = vmul.f32 %v92, %v120
  %v126 = vmul.f32 %v99, %v120
  %v127 = vmul.f32 %v106, %v120
  %v128 = vmul.f32 %v113, %v120
  %v129 = vsub.f32 %v25, %v121
  %v130 = vsub.f32 %v26, %v122
  %v131 = vsub.f32 %v27, %v123
  %v132 = vsub.f32 %v28, %v124
  %v133 = vsub.f32 %v29, %v125
  %v134 = vsub.f32 %v30, %v126
  %v135 = vsub.f32 %v31, %v127
  %v136 = vsub.f32 %v32, %v128
  %v137 = vsub.f32 %v33, %v121
  %v138 = vsub.f32 %v34, %v122
  %v139 = vsub.f32 %v35, %v123
  %v140 = vsub.f32 %v36, %v124
  %v141 = vsub.f32 %v37, %v125
  %v142 = vsub.f32 %v38, %v126
  %v143 = vsub.f32 %v39, %v127
  %v144 = vsub.f32 %v40, %v128
  %v145 = vsub.f32 %v41, %v121
  %v146 = vsub.f32 %v42, %v122
  %v147 = vsub.f32 %v43, %v123
  %v148 = vsub.f32 %v44, %v124
  %v149 = vsub.f32 %v45, %v125
  %v150 = vsub.f32 %v46, %v126
  %v151 = vsub.f32 %v47, %v127
  %v152 = vsub.f32 %v48, %v128
  %v153 = vsub.f32 %v49, %v121
  %v154 = vsub.f32 %v50, %v122
  %v155 = vsub.f32 %v51, %v123
  %v156 = vsub.f32 %v52, %v124
  %v157 = vsub.f32 %v53, %v125
  %v158 = vsub.f32 %v54, %v126
  %v159 = vsub.f32 %v55, %v127
  %v160 = vsub.f32 %v56, %v128
  %v161 = vmul.f32 %v129, %v129
  %v162 = vmul.f32 %v130, %v130
  %v163 = vmul.f32 %v131, %v131
  %v164 = vmul.f32 %v132, %v132
  %v165 = vmul.f32 %v133, %v133
  %v166 = vmul.f32 %v134, %v134
  %v167 = vmul.f32 %v135, %v135
  %v168 = vmul.f32 %v136, %v136
  %v169 = vmul.f32 %v137, %v137
  %v170 = vmul.f32 %v138, %v138
  %v171 = vmul.f32 %v139, %v139
  %v172 = vmul.f32 %v140, %v140
  %v173 = vmul.f32 %v141, %v141
  %v174 = vmul.f32 %v142, %v142
  %v175 = vmul.f32 %v143, %v143
  %v176 = vmul.f32 %v144, %v144
  %v177 = vmul.f32 %v145, %v145
  %v178 = vmul.f32 %v146, %v146
  %v179 = vmul.f32 %v147, %v147
  %v180 = vmul.f32 %v148, %v148
  %v181 = vmul.f32 %v149, %v149
  %v182 = vmul.f32 %v150, %v150
  %v183 = vmul.f32 %v151, %v151
  %v184 = vmul.f32 %v152, %v152
  %v185 = vmul.f32 %v153, %v153
  %v186 = vmul.f32 %v154, %v154
  %v187 = vmul.f32 %v155, %v155
  %v188 = vmul.f32 %v156, %v156
  %v189 = vmul.f32 %v157, %v157
  %v190 = vmul.f32 %v158, %v158
  %v191 = vmul.f32 %v159, %v159
  %v192 = vmul.f32 %v160, %v160
  %v193 = vsel %vm57, %v161, 0.0
  %v194 = vsel %vm57, %v169, 0.0
  %v195 = vadd.f32 %v193, %v194
  %v196 = vsel %vm57, %v177, 0.0
  %v197 = vadd.f32 %v195, %v196
  %v198 = vsel %vm57, %v185, 0.0
  %v199 = vadd.f32 %v197, %v198
  %v200 = vsel %vm57, %v162, 0.0
  %v201 = vsel %vm57, %v170, 0.0
  %v202 = vadd.f32 %v200, %v201
  %v203 = vsel %vm57, %v178, 0.0
  %v204 = vadd.f32 %v202, %v203
  %v205 = vsel %vm57, %v186, 0.0
  %v206 = vadd.f32 %v204, %v205
  %v207 = vsel %vm57, %v163, 0.0
  %v208 = vsel %vm57, %v171, 0.0
  %v209 = vadd.f32 %v207, %v208
  %v210 = vsel %vm57, %v179, 0.0
  %v211 = vadd.f32 %v209, %v210
  %v212 = vsel %vm57, %v187, 0.0
  %v213 = vadd.f32 %v211, %v212
  %v214 = vsel %vm57, %v164, 0.0
  %v215 = vsel %vm57, %v172, 0.0
  %v216 = vadd.f32 %v214, %v215
  %v217 = vsel %vm57, %v180, 0.0
  %v218 = vadd.f32 %v216, %v217
  %v219 = vsel %vm57, %v188, 0.0
  %v220 = vadd.f32 %v218, %v219
  %v221 = vsel %vm57, %v165, 0.0
  %v222 = vsel %vm57, %v173, 0.0
  %v223 = vadd.f32 %v221, %v222
  %v224 = vsel %vm57, %v181, 0.0
  %v225 = vadd.f32 %v223, %v224
  %v226 = vsel %vm57, %v189, 0.0
  %v227 = vadd.f32 %v225, %v226
  %v228 = vsel %vm57, %v166, 0.0
  %v229 = vsel %vm57, %v174, 0.0
  %v230 = vadd.f32 %v228, %v229
  %v231 = vsel %vm57, %v182, 0.0
  %v232 = vadd.f32 %v230, %v231
  %v233 = vsel %vm57, %v190, 0.0
  %v234 = vadd.f32 %v232, %v233
  %v235 = vsel %vm57, %v167, 0.0
  %v236 = vsel %vm57, %v175, 0.0
  %v237 = vadd.f32 %v235, %v236
  %v238 = vsel %vm57, %v183, 0.0
  %v239 = vadd.f32 %v237, %v238
  %v240 = vsel %vm57, %v191, 0.0
  %v241 = vadd.f32 %v239, %v240
  %v242 = vsel %vm57, %v168, 0.0
  %v243 = vsel %vm57, %v176, 0.0
  %v244 = vadd.f32 %v242, %v243
  %v245 = vsel %vm57, %v184, 0.0
  %v246 = vadd.f32 %v244, %v245
  %v247 = vsel %vm57, %v192, 0.0
  %v248 = vadd.f32 %v246, %v247
  %v249 = vmul.f32 %v199, %v120
  %v250 = vmul.f32 %v206, %v120
  %v251 = vmul.f32 %v213, %v120
  %v252 = vmul.f32 %v220, %v120
  %v253 = vmul.f32 %v227, %v120
  %v254 = vmul.f32 %v234, %v120
  %v255 = vmul.f32 %v241, %v120
  %v256 = vmul.f32 %v248, %v120
  %v257 = vadd.f32 %v249, 1e-08
  %v258 = vadd.f32 %v250, 1e-08
  %v259 = vadd.f32 %v251, 1e-08
  %v260 = vadd.f32 %v252, 1e-08
  %v261 = vadd.f32 %v253, 1e-08
  %v262 = vadd.f32 %v254, 1e-08
  %v263 = vadd.f32 %v255, 1e-08
  %v264 = vadd.f32 %v256, 1e-08
  %v265 = vrsqrt.pop %v257
  %v266 = vmul.f32 %v265, %v257
  %v267 = vmul.f32 %v266, %v265
  %v268 = vmul.f32 0.5, %v267
  %v269 = vsub.f32 1.5, %v268
  %v270 = vmul.f32 %v265, %v269
  %v271 = vmul.f32 %v257, %v270
  %vm272 = vcmp.eq.f32.partialorder %v257, inf
  %v273 = vsel %vm272, %v257, %v271
  %vm274 = vcmp.eq.f32.partialorder %v257, 0.0
  %v275 = vand.u32 %v257, 2147483648
  %v276 = vsel %vm274, %v275, %v273
  %v277 = vrsqrt.pop %v258
  %v278 = vmul.f32 %v277, %v258
  %v279 = vmul.f32 %v278, %v277
  %v280 = vmul.f32 0.5, %v279
  %v281 = vsub.f32 1.5, %v280
  %v282 = vmul.f32 %v277, %v281
  %v283 = vmul.f32 %v258, %v282
  %vm284 = vcmp.eq.f32.partialorder %v258, inf
  %v285 = vsel %vm284, %v258, %v283
  %vm286 = vcmp.eq.f32.partialorder %v258, 0.0
  %v287 = vand.u32 %v258, 2147483648
  %v288 = vsel %vm286, %v287, %v285
  %v289 = vrsqrt.pop %v259
  %v290 = vmul.f32 %v289, %v259
  %v291 = vmul.f32 %v290, %v289
  %v292 = vmul.f32 0.5, %v291
  %v293 = vsub.f32 1.5, %v292
  %v294 = vmul.f32 %v289, %v293
  %v295 = vmul.f32 %v259, %v294
  %vm296 = vcmp.eq.f32.partialorder %v259, inf
  %v297 = vsel %vm296, %v259, %v295
  %vm298 = vcmp.eq.f32.partialorder %v259, 0.0
  %v299 = vand.u32 %v259, 2147483648
  %v300 = vsel %vm298, %v299, %v297
  %v301 = vrsqrt.pop %v260
  %v302 = vmul.f32 %v301, %v260
  %v303 = vmul.f32 %v302, %v301
  %v304 = vmul.f32 0.5, %v303
  %v305 = vsub.f32 1.5, %v304
  %v306 = vmul.f32 %v301, %v305
  %v307 = vmul.f32 %v260, %v306
  %vm308 = vcmp.eq.f32.partialorder %v260, inf
  %v309 = vsel %vm308, %v260, %v307
  %vm310 = vcmp.eq.f32.partialorder %v260, 0.0
  %v311 = vand.u32 %v260, 2147483648
  %v312 = vsel %vm310, %v311, %v309
  %v313 = vrsqrt.pop %v261
  %v314 = vmul.f32 %v313, %v261
  %v315 = vmul.f32 %v314, %v313
  %v316 = vmul.f32 0.5, %v315
  %v317 = vsub.f32 1.5, %v316
  %v318 = vmul.f32 %v313, %v317
  %v319 = vmul.f32 %v261, %v318
  %vm320 = vcmp.eq.f32.partialorder %v261, inf
  %v321 = vsel %vm320, %v261, %v319
  %vm322 = vcmp.eq.f32.partialorder %v261, 0.0
  %v323 = vand.u32 %v261, 2147483648
  %v324 = vsel %vm322, %v323, %v321
  %v325 = vrsqrt.pop %v262
  %v326 = vmul.f32 %v325, %v262
  %v327 = vmul.f32 %v326, %v325
  %v328 = vmul.f32 0.5, %v327
  %v329 = vsub.f32 1.5, %v328
  %v330 = vmul.f32 %v325, %v329
  %v331 = vmul.f32 %v262, %v330
  %vm332 = vcmp.eq.f32.partialorder %v262, inf
  %v333 = vsel %vm332, %v262, %v331
  %vm334 = vcmp.eq.f32.partialorder %v262, 0.0
  %v335 = vand.u32 %v262, 2147483648
  %v336 = vsel %vm334, %v335, %v333
  %v337 = vrsqrt.pop %v263
  %v338 = vmul.f32 %v337, %v263
  %v339 = vmul.f32 %v338, %v337
  %v340 = vmul.f32 0.5, %v339
  %v341 = vsub.f32 1.5, %v340
  %v342 = vmul.f32 %v337, %v341
  %v343 = vmul.f32 %v263, %v342
  %vm344 = vcmp.eq.f32.partialorder %v263, inf
  %v345 = vsel %vm344, %v263, %v343
  %vm346 = vcmp.eq.f32.partialorder %v263, 0.0
  %v347 = vand.u32 %v263, 2147483648
  %v348 = vsel %vm346, %v347, %v345
  %v349 = vrsqrt.pop %v264
  %v350 = vmul.f32 %v349, %v264
  %v351 = vmul.f32 %v350, %v349
  %v352 = vmul.f32 0.5, %v351
  %v353 = vsub.f32 1.5, %v352
  %v354 = vmul.f32 %v349, %v353
  %v355 = vmul.f32 %v264, %v354
  %vm356 = vcmp.eq.f32.partialorder %v264, inf
  %v357 = vsel %vm356, %v264, %v355
  %vm358 = vcmp.eq.f32.partialorder %v264, 0.0
  %v359 = vand.u32 %v264, 2147483648
  %v360 = vsel %vm358, %v359, %v357
  %v361 = vsel %vm57, %v276, 0.0
  %362 = vadd.xlane.f32.xlu0 %v361
  %v363 = vpop.xlane.xlu0 %362
  %v364 = vsel %vm57, %v288, 0.0
  %365 = vadd.xlane.f32.xlu0 %v364
  %v366 = vpop.xlane.xlu0 %365
  %v367 = vsel %vm57, %v300, 0.0
  %368 = vadd.xlane.f32.xlu0 %v367
  %v369 = vpop.xlane.xlu0 %368
  %v370 = vsel %vm57, %v312, 0.0
  %371 = vadd.xlane.f32.xlu0 %v370
  %v372 = vpop.xlane.xlu0 %371
  %v373 = vsel %vm57, %v324, 0.0
  %374 = vadd.xlane.f32.xlu0 %v373
  %v375 = vpop.xlane.xlu0 %374
  %v376 = vsel %vm57, %v336, 0.0
  %377 = vadd.xlane.f32.xlu0 %v376
  %v378 = vpop.xlane.xlu0 %377
  %v379 = vsel %vm57, %v348, 0.0
  %380 = vadd.xlane.f32.xlu0 %v379
  %v381 = vpop.xlane.xlu0 %380
  %v382 = vsel %vm57, %v360, 0.0
  %383 = vadd.xlane.f32.xlu0 %v382
  %v384 = vpop.xlane.xlu0 %383
  %v385 = vrot.slane %v363, 4
  %v386 = vadd.f32 %v363, %v385
  %v387 = vrot.slane %v386, 2
  %v388 = vadd.f32 %v386, %v387
  %v389 = vrot.slane %v388, 1
  %v390 = vadd.f32 %v388, %v389
  %v391 = vrot.slane %v366, 4
  %v392 = vadd.f32 %v366, %v391
  %v393 = vrot.slane %v392, 2
  %v394 = vadd.f32 %v392, %v393
  %v395 = vrot.slane %v394, 1
  %v396 = vadd.f32 %v394, %v395
  %v397 = vrot.slane %v369, 4
  %v398 = vadd.f32 %v369, %v397
  %v399 = vrot.slane %v398, 2
  %v400 = vadd.f32 %v398, %v399
  %v401 = vrot.slane %v400, 1
  %v402 = vadd.f32 %v400, %v401
  %v403 = vrot.slane %v372, 4
  %v404 = vadd.f32 %v372, %v403
  %v405 = vrot.slane %v404, 2
  %v406 = vadd.f32 %v404, %v405
  %v407 = vrot.slane %v406, 1
  %v408 = vadd.f32 %v406, %v407
  %v409 = vrot.slane %v375, 4
  %v410 = vadd.f32 %v375, %v409
  %v411 = vrot.slane %v410, 2
  %v412 = vadd.f32 %v410, %v411
  %v413 = vrot.slane %v412, 1
  %v414 = vadd.f32 %v412, %v413
  %v415 = vrot.slane %v378, 4
  %v416 = vadd.f32 %v378, %v415
  %v417 = vrot.slane %v416, 2
  %v418 = vadd.f32 %v416, %v417
  %v419 = vrot.slane %v418, 1
  %v420 = vadd.f32 %v418, %v419
  %v421 = vrot.slane %v381, 4
  %v422 = vadd.f32 %v381, %v421
  %v423 = vrot.slane %v422, 2
  %v424 = vadd.f32 %v422, %v423
  %v425 = vrot.slane %v424, 1
  %v426 = vadd.f32 %v424, %v425
  %v427 = vrot.slane %v384, 4
  %v428 = vadd.f32 %v384, %v427
  %v429 = vrot.slane %v428, 2
  %v430 = vadd.f32 %v428, %v429
  %v431 = vrot.slane %v430, 1
  %v432 = vadd.f32 %v430, %v431
  %v433 = vadd.f32 %v390, %v396
  %v434 = vadd.f32 %v433, %v402
  %v435 = vadd.f32 %v434, %v408
  %v436 = vadd.f32 %v435, %v414
  %v437 = vadd.f32 %v436, %v420
  %v438 = vadd.f32 %v437, %v426
  %v439 = vadd.f32 %v438, %v432
  %v440 = vmul.f32 %v439, 0.00390625
  %vm441 = vcmask 39936
  %442 = vst.msk [vmem:[#allocation2] sm:$0xff] %vm441, 0.0
  %vm443 = vcmask 33792
  %444 = vst.msk [vmem:[#allocation2 + $0x8] sm:$0x3] %vm443, 0.0
  %445 = vst.msk [vmem:[#allocation2 + $0x10] sm:$0xff] %vm441, 0.0
  %446 = vst.msk [vmem:[#allocation2 + $0x18] sm:$0x3] %vm443, 0.0
  %447 = vst.msk [vmem:[#allocation2 + $0x20] sm:$0xff] %vm441, 0.0
  %448 = vst.msk [vmem:[#allocation2 + $0x28] sm:$0x3] %vm443, 0.0
  %449 = vst.msk [vmem:[#allocation2 + $0x30] sm:$0xff] %vm441, 0.0
  %450 = vst.msk [vmem:[#allocation2 + $0x38] sm:$0x3] %vm443, 0.0
  %451 = vst.msk [vmem:[#allocation2 + $0x40] sm:$0xff] %vm441, 0.0
  %452 = vst.msk [vmem:[#allocation2 + $0x48] sm:$0x3] %vm443, 0.0
  %453 = vst.msk [vmem:[#allocation2 + $0x50] sm:$0xff] %vm441, 0.0
  %454 = vst.msk [vmem:[#allocation2 + $0x58] sm:$0x3] %vm443, 0.0
  %455 = vst.msk [vmem:[#allocation2 + $0x60] sm:$0xff] %vm441, 0.0
  %456 = vst.msk [vmem:[#allocation2 + $0x68] sm:$0x3] %vm443, 0.0
  %457 = vst.msk [vmem:[#allocation2 + $0x70] sm:$0xff] %vm441, 0.0
  %458 = vst.msk [vmem:[#allocation2 + $0x78] sm:$0x3] %vm443, 0.0
  %459 = vst.msk [vmem:[#allocation2 + $0x80] sm:$0xff] %vm441, 0.0
  %460 = vst.msk [vmem:[#allocation2 + $0x88] sm:$0x3] %vm443, 0.0
  %461 = vst.msk [vmem:[#allocation2 + $0x90] sm:$0xff] %vm441, 0.0
  %462 = vst.msk [vmem:[#allocation2 + $0x98] sm:$0x3] %vm443, 0.0
  %463 = vst.msk [vmem:[#allocation2 + $0xa0] sm:$0xff] %vm441, 0.0
  %464 = vst.msk [vmem:[#allocation2 + $0xa8] sm:$0x3] %vm443, 0.0
  %465 = vst.msk [vmem:[#allocation2 + $0xb0] sm:$0xff] %vm441, 0.0
  %466 = vst.msk [vmem:[#allocation2 + $0xb8] sm:$0x3] %vm443, 0.0
  %467 = vst.msk [vmem:[#allocation2 + $0xc0] sm:$0xff] %vm441, 0.0
  %468 = vst.msk [vmem:[#allocation2 + $0xc8] sm:$0x3] %vm443, 0.0
  %469 = vst.msk [vmem:[#allocation2 + $0xd0] sm:$0xff] %vm441, 0.0
  %470 = vst.msk [vmem:[#allocation2 + $0xd8] sm:$0x3] %vm443, 0.0
  %471 = vst.msk [vmem:[#allocation2 + $0xe0] sm:$0xff] %vm441, 0.0
  %472 = vst.msk [vmem:[#allocation2 + $0xe8] sm:$0x3] %vm443, 0.0
  %473 = vst.msk [vmem:[#allocation2 + $0xf0] sm:$0xff] %vm441, 0.0
  %474 = vst.msk [vmem:[#allocation2 + $0xf8] sm:$0x3] %vm443, 0.0
  %475 = vst.msk [vmem:[#allocation2 + $0x100] sm:$0xff] %vm441, 0.0
  %476 = vst.msk [vmem:[#allocation2 + $0x108] sm:$0x3] %vm443, 0.0
  %477 = vst.msk [vmem:[#allocation2 + $0x110] sm:$0xff] %vm441, 0.0
  %478 = vst.msk [vmem:[#allocation2 + $0x118] sm:$0x3] %vm443, 0.0
  %479 = vst.msk [vmem:[#allocation2 + $0x120] sm:$0xff] %vm441, 0.0
  %480 = vst.msk [vmem:[#allocation2 + $0x128] sm:$0x3] %vm443, 0.0
  %481 = vst.msk [vmem:[#allocation2 + $0x130] sm:$0xff] %vm441, 0.0
  %482 = vst.msk [vmem:[#allocation2 + $0x138] sm:$0x3] %vm443, 0.0
  %483 = vst.msk [vmem:[#allocation2 + $0x140] sm:$0xff] %vm441, 0.0
  %484 = vst.msk [vmem:[#allocation2 + $0x148] sm:$0x3] %vm443, 0.0
  %485 = vst.msk [vmem:[#allocation2 + $0x150] sm:$0xff] %vm441, 0.0
  %486 = vst.msk [vmem:[#allocation2 + $0x158] sm:$0x3] %vm443, 0.0
  %487 = vst.msk [vmem:[#allocation2 + $0x160] sm:$0xff] %vm441, 0.0
  %488 = vst.msk [vmem:[#allocation2 + $0x168] sm:$0x3] %vm443, 0.0
  %489 = vst.msk [vmem:[#allocation2 + $0x170] sm:$0xff] %vm441, 0.0
  %490 = vst.msk [vmem:[#allocation2 + $0x178] sm:$0x3] %vm443, 0.0
  %491 = vst.msk [vmem:[#allocation2 + $0x180] sm:$0xff] %vm441, 0.0
  %492 = vst.msk [vmem:[#allocation2 + $0x188] sm:$0x3] %vm443, 0.0
  %493 = vst.msk [vmem:[#allocation2 + $0x190] sm:$0xff] %vm441, 0.0
  %494 = vst.msk [vmem:[#allocation2 + $0x198] sm:$0x3] %vm443, 0.0
  %495 = vst.msk [vmem:[#allocation2 + $0x1a0] sm:$0xff] %vm441, 0.0
  %496 = vst.msk [vmem:[#allocation2 + $0x1a8] sm:$0x3] %vm443, 0.0
  %497 = vst.msk [vmem:[#allocation2 + $0x1b0] sm:$0xff] %vm441, 0.0
  %498 = vst.msk [vmem:[#allocation2 + $0x1b8] sm:$0x3] %vm443, 0.0
  %499 = vst.msk [vmem:[#allocation2 + $0x1c0] sm:$0xff] %vm441, 0.0
  %500 = vst.msk [vmem:[#allocation2 + $0x1c8] sm:$0x3] %vm443, 0.0
  %501 = vst.msk [vmem:[#allocation2 + $0x1d0] sm:$0xff] %vm441, 0.0
  %502 = vst.msk [vmem:[#allocation2 + $0x1d8] sm:$0x3] %vm443, 0.0
  %503 = vst.msk [vmem:[#allocation2 + $0x1e0] sm:$0xff] %vm441, 0.0
  %504 = vst.msk [vmem:[#allocation2 + $0x1e8] sm:$0x3] %vm443, 0.0
  %505 = vst.msk [vmem:[#allocation2 + $0x1f0] sm:$0xff] %vm441, 0.0
  %506 = vst.msk [vmem:[#allocation2 + $0x1f8] sm:$0x3] %vm443, 0.0
  %507 = vst.msk [vmem:[#allocation2 + $0x200] sm:$0xff] %vm441, 0.0
  %508 = vst.msk [vmem:[#allocation2 + $0x208] sm:$0x3] %vm443, 0.0
  %509 = vst.msk [vmem:[#allocation2 + $0x210] sm:$0xff] %vm441, 0.0
  %510 = vst.msk [vmem:[#allocation2 + $0x218] sm:$0x3] %vm443, 0.0
  %511 = vst.msk [vmem:[#allocation2 + $0x220] sm:$0xff] %vm441, 0.0
  %512 = vst.msk [vmem:[#allocation2 + $0x228] sm:$0x3] %vm443, 0.0
  %513 = vst.msk [vmem:[#allocation2 + $0x230] sm:$0xff] %vm441, 0.0
  %514 = vst.msk [vmem:[#allocation2 + $0x238] sm:$0x3] %vm443, 0.0
  %515 = vst.msk [vmem:[#allocation2 + $0x240] sm:$0xff] %vm441, 0.0
  %516 = vst.msk [vmem:[#allocation2 + $0x248] sm:$0x3] %vm443, 0.0
  %517 = vst.msk [vmem:[#allocation2 + $0x250] sm:$0xff] %vm441, 0.0
  %518 = vst.msk [vmem:[#allocation2 + $0x258] sm:$0x3] %vm443, 0.0
  %519 = vst.msk [vmem:[#allocation2 + $0x260] sm:$0xff] %vm441, 0.0
  %520 = vst.msk [vmem:[#allocation2 + $0x268] sm:$0x3] %vm443, 0.0
  %521 = vst.msk [vmem:[#allocation2 + $0x270] sm:$0xff] %vm441, 0.0
  %522 = vst.msk [vmem:[#allocation2 + $0x278] sm:$0x3] %vm443, 0.0
  %524 = vrot.lane.b32.xlu0 %v440, 4
  %v525 = vpop.permute.xlu0 %524
  %v527 = vsel %vm57, %v25, %v525
  %v528 = vsel %vm57, %v26, %v525
  %v529 = vsel %vm57, %v27, %v525
  %v530 = vsel %vm57, %v28, %v525
  %v531 = vsel %vm57, %v29, %v525
  %v532 = vsel %vm57, %v30, %v525
  %v533 = vsel %vm57, %v31, %v525
  %v534 = vsel %vm57, %v32, %v525
  %v535 = vsel %vm57, %v33, %v525
  %v536 = vsel %vm57, %v34, %v525
  %v537 = vsel %vm57, %v35, %v525
  %v538 = vsel %vm57, %v36, %v525
  %v539 = vsel %vm57, %v37, %v525
  %v540 = vsel %vm57, %v38, %v525
  %v541 = vsel %vm57, %v39, %v525
  %v542 = vsel %vm57, %v40, %v525
  %v543 = vsel %vm57, %v41, %v525
  %v544 = vsel %vm57, %v42, %v525
  %v545 = vsel %vm57, %v43, %v525
  %v546 = vsel %vm57, %v44, %v525
  %v547 = vsel %vm57, %v45, %v525
  %v548 = vsel %vm57, %v46, %v525
  %v549 = vsel %vm57, %v47, %v525
  %v550 = vsel %vm57, %v48, %v525
  %v551 = vsel %vm57, %v49, %v525
  %v552 = vsel %vm57, %v50, %v525
  %v553 = vsel %vm57, %v51, %v525
  %v554 = vsel %vm57, %v52, %v525
  %v555 = vsel %vm57, %v53, %v525
  %v556 = vsel %vm57, %v54, %v525
  %v557 = vsel %vm57, %v55, %v525
  %v558 = vsel %vm57, %v56, %v525
  %s559 = scalar_lea.vmem [#allocation2], 16
  %560 = vst.msk [vmem:[%s559 + $0x1] sm:$0xff] %vm441, %v527
  %561 = vst.msk [vmem:[%s559 + $0x11] sm:$0xff] %vm441, %v528
  %562 = vst.msk [vmem:[%s559 + $0x21] sm:$0xff] %vm441, %v529
  %563 = vst.msk [vmem:[%s559 + $0x31] sm:$0xff] %vm441, %v530
  %564 = vst.msk [vmem:[%s559 + $0x41] sm:$0xff] %vm441, %v531
  %565 = vst.msk [vmem:[%s559 + $0x51] sm:$0xff] %vm441, %v532
  %566 = vst.msk [vmem:[%s559 + $0x61] sm:$0xff] %vm441, %v533
  %567 = vst.msk [vmem:[%s559 + $0x71] sm:$0xff] %vm441, %v534
  %568 = vst.msk [vmem:[%s559 + $0xa1] sm:$0xff] %vm441, %v535
  %569 = vst.msk [vmem:[%s559 + $0xb1] sm:$0xff] %vm441, %v536
  %570 = vst.msk [vmem:[%s559 + $0xc1] sm:$0xff] %vm441, %v537
  %571 = vst.msk [vmem:[%s559 + $0xd1] sm:$0xff] %vm441, %v538
  %572 = vst.msk [vmem:[%s559 + $0xe1] sm:$0xff] %vm441, %v539
  %573 = vst.msk [vmem:[%s559 + $0xf1] sm:$0xff] %vm441, %v540
  %574 = vst.msk [vmem:[%s559 + $0x101] sm:$0xff] %vm441, %v541
  %575 = vst.msk [vmem:[%s559 + $0x111] sm:$0xff] %vm441, %v542
  %576 = vst.msk [vmem:[%s559 + $0x141] sm:$0xff] %vm441, %v543
  %577 = vst.msk [vmem:[%s559 + $0x151] sm:$0xff] %vm441, %v544
  %578 = vst.msk [vmem:[%s559 + $0x161] sm:$0xff] %vm441, %v545
  %579 = vst.msk [vmem:[%s559 + $0x171] sm:$0xff] %vm441, %v546
  %580 = vst.msk [vmem:[%s559 + $0x181] sm:$0xff] %vm441, %v547
  %581 = vst.msk [vmem:[%s559 + $0x191] sm:$0xff] %vm441, %v548
  %582 = vst.msk [vmem:[%s559 + $0x1a1] sm:$0xff] %vm441, %v549
  %583 = vst.msk [vmem:[%s559 + $0x1b1] sm:$0xff] %vm441, %v550
  %584 = vst.msk [vmem:[%s559 + $0x1e1] sm:$0xff] %vm441, %v551
  %585 = vst.msk [vmem:[%s559 + $0x1f1] sm:$0xff] %vm441, %v552
  %586 = vst.msk [vmem:[%s559 + $0x201] sm:$0xff] %vm441, %v553
  %587 = vst.msk [vmem:[%s559 + $0x211] sm:$0xff] %vm441, %v554
  %588 = vst.msk [vmem:[%s559 + $0x221] sm:$0xff] %vm441, %v555
  %589 = vst.msk [vmem:[%s559 + $0x231] sm:$0xff] %vm441, %v556
  %590 = vst.msk [vmem:[%s559 + $0x241] sm:$0xff] %vm441, %v557
  %591 = vst.msk [vmem:[%s559 + $0x251] sm:$0xff] %vm441, %v558
  %v592 = vld [vmem:[%s1] sm:$0xf]
  %v593 = vld [vmem:[%s1 + $0x4] sm:$0xf]
  %v594 = vld [vmem:[%s1 + $0x8] sm:$0xf]
  %v595 = vld [vmem:[%s1 + $0xc] sm:$0xf]
  %v596 = vld [vmem:[%s1 + $0x10] sm:$0xf]
  %v597 = vld [vmem:[%s1 + $0x14] sm:$0xf]
  %v598 = vld [vmem:[%s1 + $0x18] sm:$0xf]
  %v599 = vld [vmem:[%s1 + $0x1c] sm:$0xf]
  %v600 = vld [vmem:[%s1 + $0x20] sm:$0xf]
  %v601 = vmul.f32 %v592, 0.1490712
  %v602 = vmul.f32 %v593, 0.1490712
  %v603 = vmul.f32 %v594, 0.1490712
  %v604 = vmul.f32 %v595, 0.1490712
  %v605 = vmul.f32 %v596, 0.1490712
  %v606 = vmul.f32 %v597, 0.1490712
  %v607 = vmul.f32 %v598, 0.1490712
  %v608 = vmul.f32 %v599, 0.1490712
  %v609 = vmul.f32 %v600, 0.1490712
  %v610 = vld [vmem:[#allocation2] sm:$0xff]
  %v611 = vld [vmem:[#allocation2 + $0x10] sm:$0xff]
  %v612 = vld [vmem:[#allocation2 + $0x20] sm:$0xff]
  %v613 = vld [vmem:[#allocation2 + $0x30] sm:$0xff]
  %v614 = vld [vmem:[#allocation2 + $0x40] sm:$0xff]
  %v615 = vld [vmem:[#allocation2 + $0x50] sm:$0xff]
  %v616 = vld [vmem:[#allocation2 + $0x60] sm:$0xff]
  %v617 = vld [vmem:[#allocation2 + $0x70] sm:$0xff]
  %v618 = vld [vmem:[#allocation2 + $0xa0] sm:$0xff]
  %v619 = vld [vmem:[#allocation2 + $0xb0] sm:$0xff]
  %v620 = vld [vmem:[#allocation2 + $0xc0] sm:$0xff]
  %v621 = vld [vmem:[#allocation2 + $0xd0] sm:$0xff]
  %v622 = vld [vmem:[#allocation2 + $0xe0] sm:$0xff]
  %v623 = vld [vmem:[#allocation2 + $0xf0] sm:$0xff]
  %v624 = vld [vmem:[#allocation2 + $0x100] sm:$0xff]
  %v625 = vld [vmem:[#allocation2 + $0x110] sm:$0xff]
  %v626 = vld [vmem:[#allocation2 + $0x140] sm:$0xff]
  %v627 = vld [vmem:[#allocation2 + $0x150] sm:$0xff]
  %v628 = vld [vmem:[#allocation2 + $0x160] sm:$0xff]
  %v629 = vld [vmem:[#allocation2 + $0x170] sm:$0xff]
  %v630 = vld [vmem:[#allocation2 + $0x180] sm:$0xff]
  %v631 = vld [vmem:[#allocation2 + $0x190] sm:$0xff]
  %v632 = vld [vmem:[#allocation2 + $0x1a0] sm:$0xff]
  %v633 = vld [vmem:[#allocation2 + $0x1b0] sm:$0xff]
  %v634 = vld [vmem:[#allocation2 + $0x1e0] sm:$0xff]
  %v635 = vld [vmem:[#allocation2 + $0x1f0] sm:$0xff]
  %v636 = vld [vmem:[#allocation2 + $0x200] sm:$0xff]
  %v637 = vld [vmem:[#allocation2 + $0x210] sm:$0xff]
  %v638 = vld [vmem:[#allocation2 + $0x220] sm:$0xff]
  %v639 = vld [vmem:[#allocation2 + $0x230] sm:$0xff]
  %v640 = vld [vmem:[#allocation2 + $0x240] sm:$0xff]
  %v641 = vld [vmem:[#allocation2 + $0x250] sm:$0xff]
  %v642 = vld [vmem:[#allocation2 + $0x1] sm:$0xff]
  %v643 = vld [vmem:[#allocation2 + $0x11] sm:$0xff]
  %v644 = vld [vmem:[#allocation2 + $0x21] sm:$0xff]
  %v645 = vld [vmem:[#allocation2 + $0x31] sm:$0xff]
  %v646 = vld [vmem:[#allocation2 + $0x41] sm:$0xff]
  %v647 = vld [vmem:[#allocation2 + $0x51] sm:$0xff]
  %v648 = vld [vmem:[#allocation2 + $0x61] sm:$0xff]
  %v649 = vld [vmem:[#allocation2 + $0x71] sm:$0xff]
  %v650 = vld [vmem:[#allocation2 + $0xa1] sm:$0xff]
  %v651 = vld [vmem:[#allocation2 + $0xb1] sm:$0xff]
  %v652 = vld [vmem:[#allocation2 + $0xc1] sm:$0xff]
  %v653 = vld [vmem:[#allocation2 + $0xd1] sm:$0xff]
  %v654 = vld [vmem:[#allocation2 + $0xe1] sm:$0xff]
  %v655 = vld [vmem:[#allocation2 + $0xf1] sm:$0xff]
  %v656 = vld [vmem:[#allocation2 + $0x101] sm:$0xff]
  %v657 = vld [vmem:[#allocation2 + $0x111] sm:$0xff]
  %v658 = vld [vmem:[#allocation2 + $0x141] sm:$0xff]
  %v659 = vld [vmem:[#allocation2 + $0x151] sm:$0xff]
  %v660 = vld [vmem:[#allocation2 + $0x161] sm:$0xff]
  %v661 = vld [vmem:[#allocation2 + $0x171] sm:$0xff]
  %v662 = vld [vmem:[#allocation2 + $0x181] sm:$0xff]
  %v663 = vld [vmem:[#allocation2 + $0x191] sm:$0xff]
  %v664 = vld [vmem:[#allocation2 + $0x1a1] sm:$0xff]
  %v665 = vld [vmem:[#allocation2 + $0x1b1] sm:$0xff]
  %v666 = vld [vmem:[#allocation2 + $0x1e1] sm:$0xff]
  %v667 = vld [vmem:[#allocation2 + $0x1f1] sm:$0xff]
  %v668 = vld [vmem:[#allocation2 + $0x201] sm:$0xff]
  %v669 = vld [vmem:[#allocation2 + $0x211] sm:$0xff]
  %v670 = vld [vmem:[#allocation2 + $0x221] sm:$0xff]
  %v671 = vld [vmem:[#allocation2 + $0x231] sm:$0xff]
  %v672 = vld [vmem:[#allocation2 + $0x241] sm:$0xff]
  %v673 = vld [vmem:[#allocation2 + $0x251] sm:$0xff]
  %v675 = vsel %vm441, %v602, 0
  %v678 = vsel %vm441, %v642, 0
  %v681 = vsel %vm441, %v643, 0
  %v684 = vsel %vm441, %v644, 0
  %v687 = vsel %vm441, %v645, 0
  %v690 = vsel %vm441, %v646, 0
  %v693 = vsel %vm441, %v647, 0
  %v696 = vsel %vm441, %v648, 0
  %v699 = vsel %vm441, %v649, 0
  %v702 = vsel %vm441, %v650, 0
  %v705 = vsel %vm441, %v651, 0
  %v708 = vsel %vm441, %v652, 0
  %v711 = vsel %vm441, %v653, 0
  %v714 = vsel %vm441, %v654, 0
  %v717 = vsel %vm441, %v655, 0
  %v720 = vsel %vm441, %v656, 0
  %v723 = vsel %vm441, %v657, 0
  %v726 = vsel %vm441, %v658, 0
  %v729 = vsel %vm441, %v659, 0
  %v732 = vsel %vm441, %v660, 0
  %v735 = vsel %vm441, %v661, 0
  %v738 = vsel %vm441, %v662, 0
  %v741 = vsel %vm441, %v663, 0
  %v744 = vsel %vm441, %v664, 0
  %v747 = vsel %vm441, %v665, 0
  %v750 = vsel %vm441, %v666, 0
  %v753 = vsel %vm441, %v667, 0
  %v756 = vsel %vm441, %v668, 0
  %v759 = vsel %vm441, %v669, 0
  %v762 = vsel %vm441, %v670, 0
  %v765 = vsel %vm441, %v671, 0
  %v768 = vsel %vm441, %v672, 0
  %v771 = vsel %vm441, %v673, 0
  %773 = vmatpush.xpose.msra.mxu0 %v723
  %774 = vmatpush.xpose.msra.mxu0 %v720
  %775 = vmatpush.xpose.msra.mxu0 %v717
  %776 = vmatpush.xpose.msra.mxu0 %v714
  %777 = vmatpush.xpose.msra.mxu0 %v711
  %778 = vmatpush.xpose.msra.mxu0 %v708
  %779 = vmatpush.xpose.msra.mxu0 %v705
  %780 = vmatpush.xpose.msra.mxu0 %v702
  %781 = vmatpush.xpose.msra.mxu0 %v699
  %782 = vmatpush.xpose.msra.mxu0 %v696
  %783 = vmatpush.xpose.msra.mxu0 %v693
  %784 = vmatpush.xpose.msra.mxu0 %v690
  %785 = vmatpush.xpose.msra.mxu0 %v687
  %786 = vmatpush.xpose.msra.mxu0 %v684
  %787 = vmatpush.xpose.msra.mxu0 %v681
  %788 = vmatpush.xpose.msra.mxu0 %v678
  %789 = vmatmul.f32.gmra.mxu0 %v675
  %v790 = vpop.f32.mrf.mxu0
  %v791 = vadd.f32 0.0, %v790
  %792 = vdwg.mxu0
  %793 = vmatpush.xpose.msra.mxu0 %v771
  %794 = vmatpush.xpose.msra.mxu0 %v768
  %795 = vmatpush.xpose.msra.mxu0 %v765
  %796 = vmatpush.xpose.msra.mxu0 %v762
  %797 = vmatpush.xpose.msra.mxu0 %v759
  %798 = vmatpush.xpose.msra.mxu0 %v756
  %799 = vmatpush.xpose.msra.mxu0 %v753
  %800 = vmatpush.xpose.msra.mxu0 %v750
  %801 = vmatpush.xpose.msra.mxu0 %v747
  %802 = vmatpush.xpose.msra.mxu0 %v744
  %803 = vmatpush.xpose.msra.mxu0 %v741
  %804 = vmatpush.xpose.msra.mxu0 %v738
  %805 = vmatpush.xpose.msra.mxu0 %v735
  %806 = vmatpush.xpose.msra.mxu0 %v732
  %807 = vmatpush.xpose.msra.mxu0 %v729
  %808 = vmatpush.xpose.msra.mxu0 %v726
  %809 = vmatmul.f32.gmra.mxu0 %v675
  %v810 = vpop.f32.mrf.mxu0
  %v811 = vadd.f32 0.0, %v810
  %812 = vdwg.mxu0
  %v814 = vsel %vm441, %v601, 0
  %v817 = vsel %vm441, %v610, 0
  %v820 = vsel %vm441, %v611, 0
  %v823 = vsel %vm441, %v612, 0
  %v826 = vsel %vm441, %v613, 0
  %v829 = vsel %vm441, %v614, 0
  %v832 = vsel %vm441, %v615, 0
  %v835 = vsel %vm441, %v616, 0
  %v838 = vsel %vm441, %v617, 0
  %v841 = vsel %vm441, %v618, 0
  %v844 = vsel %vm441, %v619, 0
  %v847 = vsel %vm441, %v620, 0
  %v850 = vsel %vm441, %v621, 0
  %v853 = vsel %vm441, %v622, 0
  %v856 = vsel %vm441, %v623, 0
  %v859 = vsel %vm441, %v624, 0
  %v862 = vsel %vm441, %v625, 0
  %v865 = vsel %vm441, %v626, 0
  %v868 = vsel %vm441, %v627, 0
  %v871 = vsel %vm441, %v628, 0
  %v874 = vsel %vm441, %v629, 0
  %v877 = vsel %vm441, %v630, 0
  %v880 = vsel %vm441, %v631, 0
  %v883 = vsel %vm441, %v632, 0
  %v886 = vsel %vm441, %v633, 0
  %v889 = vsel %vm441, %v634, 0
  %v892 = vsel %vm441, %v635, 0
  %v895 = vsel %vm441, %v636, 0
  %v898 = vsel %vm441, %v637, 0
  %v901 = vsel %vm441, %v638, 0
  %v904 = vsel %vm441, %v639, 0
  %v907 = vsel %vm441, %v640, 0
  %v910 = vsel %vm441, %v641, 0
  %912 = vmatpush.xpose.msra.mxu0 %v862
  %913 = vmatpush.xpose.msra.mxu0 %v859
  %914 = vmatpush.xpose.msra.mxu0 %v856
  %915 = vmatpush.xpose.msra.mxu0 %v853
  %916 = vmatpush.xpose.msra.mxu0 %v850
  %917 = vmatpush.xpose.msra.mxu0 %v847
  %918 = vmatpush.xpose.msra.mxu0 %v844
  %919 = vmatpush.xpose.msra.mxu0 %v841
  %920 = vmatpush.xpose.msra.mxu0 %v838
  %921 = vmatpush.xpose.msra.mxu0 %v835
  %922 = vmatpush.xpose.msra.mxu0 %v832
  %923 = vmatpush.xpose.msra.mxu0 %v829
  %924 = vmatpush.xpose.msra.mxu0 %v826
  %925 = vmatpush.xpose.msra.mxu0 %v823
  %926 = vmatpush.xpose.msra.mxu0 %v820
  %927 = vmatpush.xpose.msra.mxu0 %v817
  %928 = vmatmul.f32.gmra.mxu0 %v814
  %v929 = vpop.f32.mrf.mxu0
  %v930 = vadd.f32 %v791, %v929
  %931 = vdwg.mxu0
  %932 = vmatpush.xpose.msra.mxu0 %v910
  %933 = vmatpush.xpose.msra.mxu0 %v907
  %934 = vmatpush.xpose.msra.mxu0 %v904
  %935 = vmatpush.xpose.msra.mxu0 %v901
  %936 = vmatpush.xpose.msra.mxu0 %v898
  %937 = vmatpush.xpose.msra.mxu0 %v895
  %938 = vmatpush.xpose.msra.mxu0 %v892
  %939 = vmatpush.xpose.msra.mxu0 %v889
  %940 = vmatpush.xpose.msra.mxu0 %v886
  %941 = vmatpush.xpose.msra.mxu0 %v883
  %942 = vmatpush.xpose.msra.mxu0 %v880
  %943 = vmatpush.xpose.msra.mxu0 %v877
  %944 = vmatpush.xpose.msra.mxu0 %v874
  %945 = vmatpush.xpose.msra.mxu0 %v871
  %946 = vmatpush.xpose.msra.mxu0 %v868
  %947 = vmatpush.xpose.msra.mxu0 %v865
  %948 = vmatmul.f32.gmra.mxu0 %v814
  %v949 = vpop.f32.mrf.mxu0
  %v950 = vadd.f32 %v811, %v949
  %951 = vdwg.mxu0
  %v952 = vld [vmem:[#allocation2 + $0x2] sm:$0xff]
  %v953 = vld [vmem:[#allocation2 + $0x12] sm:$0xff]
  %v954 = vld [vmem:[#allocation2 + $0x22] sm:$0xff]
  %v955 = vld [vmem:[#allocation2 + $0x32] sm:$0xff]
  %v956 = vld [vmem:[#allocation2 + $0x42] sm:$0xff]
  %v957 = vld [vmem:[#allocation2 + $0x52] sm:$0xff]
  %v958 = vld [vmem:[#allocation2 + $0x62] sm:$0xff]
  %v959 = vld [vmem:[#allocation2 + $0x72] sm:$0xff]
  %v960 = vld [vmem:[#allocation2 + $0xa2] sm:$0xff]
  %v961 = vld [vmem:[#allocation2 + $0xb2] sm:$0xff]
  %v962 = vld [vmem:[#allocation2 + $0xc2] sm:$0xff]
  %v963 = vld [vmem:[#allocation2 + $0xd2] sm:$0xff]
  %v964 = vld [vmem:[#allocation2 + $0xe2] sm:$0xff]
  %v965 = vld [vmem:[#allocation2 + $0xf2] sm:$0xff]
  %v966 = vld [vmem:[#allocation2 + $0x102] sm:$0xff]
  %v967 = vld [vmem:[#allocation2 + $0x112] sm:$0xff]
  %v968 = vld [vmem:[#allocation2 + $0x142] sm:$0xff]
  %v969 = vld [vmem:[#allocation2 + $0x152] sm:$0xff]
  %v970 = vld [vmem:[#allocation2 + $0x162] sm:$0xff]
  %v971 = vld [vmem:[#allocation2 + $0x172] sm:$0xff]
  %v972 = vld [vmem:[#allocation2 + $0x182] sm:$0xff]
  %v973 = vld [vmem:[#allocation2 + $0x192] sm:$0xff]
  %v974 = vld [vmem:[#allocation2 + $0x1a2] sm:$0xff]
  %v975 = vld [vmem:[#allocation2 + $0x1b2] sm:$0xff]
  %v976 = vld [vmem:[#allocation2 + $0x1e2] sm:$0xff]
  %v977 = vld [vmem:[#allocation2 + $0x1f2] sm:$0xff]
  %v978 = vld [vmem:[#allocation2 + $0x202] sm:$0xff]
  %v979 = vld [vmem:[#allocation2 + $0x212] sm:$0xff]
  %v980 = vld [vmem:[#allocation2 + $0x222] sm:$0xff]
  %v981 = vld [vmem:[#allocation2 + $0x232] sm:$0xff]
  %v982 = vld [vmem:[#allocation2 + $0x242] sm:$0xff]
  %v983 = vld [vmem:[#allocation2 + $0x252] sm:$0xff]
  %v985 = vsel %vm441, %v603, 0
  %v988 = vsel %vm441, %v952, 0
  %v991 = vsel %vm441, %v953, 0
  %v994 = vsel %vm441, %v954, 0
  %v997 = vsel %vm441, %v955, 0
  %v1000 = vsel %vm441, %v956, 0
  %v1003 = vsel %vm441, %v957, 0
  %v1006 = vsel %vm441, %v958, 0
  %v1009 = vsel %vm441, %v959, 0
  %v1012 = vsel %vm441, %v960, 0
  %v1015 = vsel %vm441, %v961, 0
  %v1018 = vsel %vm441, %v962, 0
  %v1021 = vsel %vm441, %v963, 0
  %v1024 = vsel %vm441, %v964, 0
  %v1027 = vsel %vm441, %v965, 0
  %v1030 = vsel %vm441, %v966, 0
  %v1033 = vsel %vm441, %v967, 0
  %v1036 = vsel %vm441, %v968, 0
  %v1039 = vsel %vm441, %v969, 0
  %v1042 = vsel %vm441, %v970, 0
  %v1045 = vsel %vm441, %v971, 0
  %v1048 = vsel %vm441, %v972, 0
  %v1051 = vsel %vm441, %v973, 0
  %v1054 = vsel %vm441, %v974, 0
  %v1057 = vsel %vm441, %v975, 0
  %v1060 = vsel %vm441, %v976, 0
  %v1063 = vsel %vm441, %v977, 0
  %v1066 = vsel %vm441, %v978, 0
  %v1069 = vsel %vm441, %v979, 0
  %v1072 = vsel %vm441, %v980, 0
  %v1075 = vsel %vm441, %v981, 0
  %v1078 = vsel %vm441, %v982, 0
  %v1081 = vsel %vm441, %v983, 0
  %1083 = vmatpush.xpose.msra.mxu0 %v1033
  %1084 = vmatpush.xpose.msra.mxu0 %v1030
  %1085 = vmatpush.xpose.msra.mxu0 %v1027
  %1086 = vmatpush.xpose.msra.mxu0 %v1024
  %1087 = vmatpush.xpose.msra.mxu0 %v1021
  %1088 = vmatpush.xpose.msra.mxu0 %v1018
  %1089 = vmatpush.xpose.msra.mxu0 %v1015
  %1090 = vmatpush.xpose.msra.mxu0 %v1012
  %1091 = vmatpush.xpose.msra.mxu0 %v1009
  %1092 = vmatpush.xpose.msra.mxu0 %v1006
  %1093 = vmatpush.xpose.msra.mxu0 %v1003
  %1094 = vmatpush.xpose.msra.mxu0 %v1000
  %1095 = vmatpush.xpose.msra.mxu0 %v997
  %1096 = vmatpush.xpose.msra.mxu0 %v994
  %1097 = vmatpush.xpose.msra.mxu0 %v991
  %1098 = vmatpush.xpose.msra.mxu0 %v988
  %1099 = vmatmul.f32.gmra.mxu0 %v985
  %v1100 = vpop.f32.mrf.mxu0
  %v1101 = vadd.f32 0.0, %v1100
  %1102 = vdwg.mxu0
  %1103 = vmatpush.xpose.msra.mxu0 %v1081
  %1104 = vmatpush.xpose.msra.mxu0 %v1078
  %1105 = vmatpush.xpose.msra.mxu0 %v1075
  %1106 = vmatpush.xpose.msra.mxu0 %v1072
  %1107 = vmatpush.xpose.msra.mxu0 %v1069
  %1108 = vmatpush.xpose.msra.mxu0 %v1066
  %1109 = vmatpush.xpose.msra.mxu0 %v1063
  %1110 = vmatpush.xpose.msra.mxu0 %v1060
  %1111 = vmatpush.xpose.msra.mxu0 %v1057
  %1112 = vmatpush.xpose.msra.mxu0 %v1054
  %1113 = vmatpush.xpose.msra.mxu0 %v1051
  %1114 = vmatpush.xpose.msra.mxu0 %v1048
  %1115 = vmatpush.xpose.msra.mxu0 %v1045
  %1116 = vmatpush.xpose.msra.mxu0 %v1042
  %1117 = vmatpush.xpose.msra.mxu0 %v1039
  %1118 = vmatpush.xpose.msra.mxu0 %v1036
  %1119 = vmatmul.f32.gmra.mxu0 %v985
  %v1120 = vpop.f32.mrf.mxu0
  %v1121 = vadd.f32 0.0, %v1120
  %1122 = vdwg.mxu0
  %v1123 = vadd.f32 %v930, %v1101
  %v1124 = vadd.f32 %v950, %v1121
  %v1125 = vld [vmem:[%s559] sm:$0xff]
  %v1126 = vld [vmem:[%s559 + $0x10] sm:$0xff]
  %v1127 = vld [vmem:[%s559 + $0x20] sm:$0xff]
  %v1128 = vld [vmem:[%s559 + $0x30] sm:$0xff]
  %v1129 = vld [vmem:[%s559 + $0x40] sm:$0xff]
  %v1130 = vld [vmem:[%s559 + $0x50] sm:$0xff]
  %v1131 = vld [vmem:[%s559 + $0x60] sm:$0xff]
  %v1132 = vld [vmem:[%s559 + $0x70] sm:$0xff]
  %v1133 = vld [vmem:[%s559 + $0xa0] sm:$0xff]
  %v1134 = vld [vmem:[%s559 + $0xb0] sm:$0xff]
  %v1135 = vld [vmem:[%s559 + $0xc0] sm:$0xff]
  %v1136 = vld [vmem:[%s559 + $0xd0] sm:$0xff]
  %v1137 = vld [vmem:[%s559 + $0xe0] sm:$0xff]
  %v1138 = vld [vmem:[%s559 + $0xf0] sm:$0xff]
  %v1139 = vld [vmem:[%s559 + $0x100] sm:$0xff]
  %v1140 = vld [vmem:[%s559 + $0x110] sm:$0xff]
  %v1141 = vld [vmem:[%s559 + $0x140] sm:$0xff]
  %v1142 = vld [vmem:[%s559 + $0x150] sm:$0xff]
  %v1143 = vld [vmem:[%s559 + $0x160] sm:$0xff]
  %v1144 = vld [vmem:[%s559 + $0x170] sm:$0xff]
  %v1145 = vld [vmem:[%s559 + $0x180] sm:$0xff]
  %v1146 = vld [vmem:[%s559 + $0x190] sm:$0xff]
  %v1147 = vld [vmem:[%s559 + $0x1a0] sm:$0xff]
  %v1148 = vld [vmem:[%s559 + $0x1b0] sm:$0xff]
  %v1149 = vld [vmem:[%s559 + $0x1e0] sm:$0xff]
  %v1150 = vld [vmem:[%s559 + $0x1f0] sm:$0xff]
  %v1151 = vld [vmem:[%s559 + $0x200] sm:$0xff]
  %v1152 = vld [vmem:[%s559 + $0x210] sm:$0xff]
  %v1153 = vld [vmem:[%s559 + $0x220] sm:$0xff]
  %v1154 = vld [vmem:[%s559 + $0x230] sm:$0xff]
  %v1155 = vld [vmem:[%s559 + $0x240] sm:$0xff]
  %v1156 = vld [vmem:[%s559 + $0x250] sm:$0xff]
  %v1158 = vsel %vm441, %v604, 0
  %v1161 = vsel %vm441, %v1125, 0
  %v1164 = vsel %vm441, %v1126, 0
  %v1167 = vsel %vm441, %v1127, 0
  %v1170 = vsel %vm441, %v1128, 0
  %v1173 = vsel %vm441, %v1129, 0
  %v1176 = vsel %vm441, %v1130, 0
  %v1179 = vsel %vm441, %v1131, 0
  %v1182 = vsel %vm441, %v1132, 0
  %v1185 = vsel %vm441, %v1133, 0
  %v1188 = vsel %vm441, %v1134, 0
  %v1191 = vsel %vm441, %v1135, 0
  %v1194 = vsel %vm441, %v1136, 0
  %v1197 = vsel %vm441, %v1137, 0
  %v1200 = vsel %vm441, %v1138, 0
  %v1203 = vsel %vm441, %v1139, 0
  %v1206 = vsel %vm441, %v1140, 0
  %v1209 = vsel %vm441, %v1141, 0
  %v1212 = vsel %vm441, %v1142, 0
  %v1215 = vsel %vm441, %v1143, 0
  %v1218 = vsel %vm441, %v1144, 0
  %v1221 = vsel %vm441, %v1145, 0
  %v1224 = vsel %vm441, %v1146, 0
  %v1227 = vsel %vm441, %v1147, 0
  %v1230 = vsel %vm441, %v1148, 0
  %v1233 = vsel %vm441, %v1149, 0
  %v1236 = vsel %vm441, %v1150, 0
  %v1239 = vsel %vm441, %v1151, 0
  %v1242 = vsel %vm441, %v1152, 0
  %v1245 = vsel %vm441, %v1153, 0
  %v1248 = vsel %vm441, %v1154, 0
  %v1251 = vsel %vm441, %v1155, 0
  %v1254 = vsel %vm441, %v1156, 0
  %1256 = vmatpush.xpose.msra.mxu0 %v1206
  %1257 = vmatpush.xpose.msra.mxu0 %v1203
  %1258 = vmatpush.xpose.msra.mxu0 %v1200
  %1259 = vmatpush.xpose.msra.mxu0 %v1197
  %1260 = vmatpush.xpose.msra.mxu0 %v1194
  %1261 = vmatpush.xpose.msra.mxu0 %v1191
  %1262 = vmatpush.xpose.msra.mxu0 %v1188
  %1263 = vmatpush.xpose.msra.mxu0 %v1185
  %1264 = vmatpush.xpose.msra.mxu0 %v1182
  %1265 = vmatpush.xpose.msra.mxu0 %v1179
  %1266 = vmatpush.xpose.msra.mxu0 %v1176
  %1267 = vmatpush.xpose.msra.mxu0 %v1173
  %1268 = vmatpush.xpose.msra.mxu0 %v1170
  %1269 = vmatpush.xpose.msra.mxu0 %v1167
  %1270 = vmatpush.xpose.msra.mxu0 %v1164
  %1271 = vmatpush.xpose.msra.mxu0 %v1161
  %1272 = vmatmul.f32.gmra.mxu0 %v1158
  %v1273 = vpop.f32.mrf.mxu0
  %v1274 = vadd.f32 0.0, %v1273
  %1275 = vdwg.mxu0
  %1276 = vmatpush.xpose.msra.mxu0 %v1254
  %1277 = vmatpush.xpose.msra.mxu0 %v1251
  %1278 = vmatpush.xpose.msra.mxu0 %v1248
  %1279 = vmatpush.xpose.msra.mxu0 %v1245
  %1280 = vmatpush.xpose.msra.mxu0 %v1242
  %1281 = vmatpush.xpose.msra.mxu0 %v1239
  %1282 = vmatpush.xpose.msra.mxu0 %v1236
  %1283 = vmatpush.xpose.msra.mxu0 %v1233
  %1284 = vmatpush.xpose.msra.mxu0 %v1230
  %1285 = vmatpush.xpose.msra.mxu0 %v1227
  %1286 = vmatpush.xpose.msra.mxu0 %v1224
  %1287 = vmatpush.xpose.msra.mxu0 %v1221
  %1288 = vmatpush.xpose.msra.mxu0 %v1218
  %1289 = vmatpush.xpose.msra.mxu0 %v1215
  %1290 = vmatpush.xpose.msra.mxu0 %v1212
  %1291 = vmatpush.xpose.msra.mxu0 %v1209
  %1292 = vmatmul.f32.gmra.mxu0 %v1158
  %v1293 = vpop.f32.mrf.mxu0
  %v1294 = vadd.f32 0.0, %v1293
  %1295 = vdwg.mxu0
  %v1296 = vadd.f32 %v1123, %v1274
  %v1297 = vadd.f32 %v1124, %v1294
  %v1298 = vld [vmem:[%s559 + $0x1] sm:$0xff]
  %v1299 = vld [vmem:[%s559 + $0x11] sm:$0xff]
  %v1300 = vld [vmem:[%s559 + $0x21] sm:$0xff]
  %v1301 = vld [vmem:[%s559 + $0x31] sm:$0xff]
  %v1302 = vld [vmem:[%s559 + $0x41] sm:$0xff]
  %v1303 = vld [vmem:[%s559 + $0x51] sm:$0xff]
  %v1304 = vld [vmem:[%s559 + $0x61] sm:$0xff]
  %v1305 = vld [vmem:[%s559 + $0x71] sm:$0xff]
  %v1306 = vld [vmem:[%s559 + $0xa1] sm:$0xff]
  %v1307 = vld [vmem:[%s559 + $0xb1] sm:$0xff]
  %v1308 = vld [vmem:[%s559 + $0xc1] sm:$0xff]
  %v1309 = vld [vmem:[%s559 + $0xd1] sm:$0xff]
  %v1310 = vld [vmem:[%s559 + $0xe1] sm:$0xff]
  %v1311 = vld [vmem:[%s559 + $0xf1] sm:$0xff]
  %v1312 = vld [vmem:[%s559 + $0x101] sm:$0xff]
  %v1313 = vld [vmem:[%s559 + $0x111] sm:$0xff]
  %v1314 = vld [vmem:[%s559 + $0x141] sm:$0xff]
  %v1315 = vld [vmem:[%s559 + $0x151] sm:$0xff]
  %v1316 = vld [vmem:[%s559 + $0x161] sm:$0xff]
  %v1317 = vld [vmem:[%s559 + $0x171] sm:$0xff]
  %v1318 = vld [vmem:[%s559 + $0x181] sm:$0xff]
  %v1319 = vld [vmem:[%s559 + $0x191] sm:$0xff]
  %v1320 = vld [vmem:[%s559 + $0x1a1] sm:$0xff]
  %v1321 = vld [vmem:[%s559 + $0x1b1] sm:$0xff]
  %v1322 = vld [vmem:[%s559 + $0x1e1] sm:$0xff]
  %v1323 = vld [vmem:[%s559 + $0x1f1] sm:$0xff]
  %v1324 = vld [vmem:[%s559 + $0x201] sm:$0xff]
  %v1325 = vld [vmem:[%s559 + $0x211] sm:$0xff]
  %v1326 = vld [vmem:[%s559 + $0x221] sm:$0xff]
  %v1327 = vld [vmem:[%s559 + $0x231] sm:$0xff]
  %v1328 = vld [vmem:[%s559 + $0x241] sm:$0xff]
  %v1329 = vld [vmem:[%s559 + $0x251] sm:$0xff]
  %v1331 = vsel %vm441, %v605, 0
  %v1334 = vsel %vm441, %v1298, 0
  %v1337 = vsel %vm441, %v1299, 0
  %v1340 = vsel %vm441, %v1300, 0
  %v1343 = vsel %vm441, %v1301, 0
  %v1346 = vsel %vm441, %v1302, 0
  %v1349 = vsel %vm441, %v1303, 0
  %v1352 = vsel %vm441, %v1304, 0
  %v1355 = vsel %vm441, %v1305, 0
  %v1358 = vsel %vm441, %v1306, 0
  %v1361 = vsel %vm441, %v1307, 0
  %v1364 = vsel %vm441, %v1308, 0
  %v1367 = vsel %vm441, %v1309, 0
  %v1370 = vsel %vm441, %v1310, 0
  %v1373 = vsel %vm441, %v1311, 0
  %v1376 = vsel %vm441, %v1312, 0
  %v1379 = vsel %vm441, %v1313, 0
  %v1382 = vsel %vm441, %v1314, 0
  %v1385 = vsel %vm441, %v1315, 0
  %v1388 = vsel %vm441, %v1316, 0
  %v1391 = vsel %vm441, %v1317, 0
  %v1394 = vsel %vm441, %v1318, 0
  %v1397 = vsel %vm441, %v1319, 0
  %v1400 = vsel %vm441, %v1320, 0
  %v1403 = vsel %vm441, %v1321, 0
  %v1406 = vsel %vm441, %v1322, 0
  %v1409 = vsel %vm441, %v1323, 0
  %v1412 = vsel %vm441, %v1324, 0
  %v1415 = vsel %vm441, %v1325, 0
  %v1418 = vsel %vm441, %v1326, 0
  %v1421 = vsel %vm441, %v1327, 0
  %v1424 = vsel %vm441, %v1328, 0
  %v1427 = vsel %vm441, %v1329, 0
  %1429 = vmatpush.xpose.msra.mxu0 %v1379
  %1430 = vmatpush.xpose.msra.mxu0 %v1376
  %1431 = vmatpush.xpose.msra.mxu0 %v1373
  %1432 = vmatpush.xpose.msra.mxu0 %v1370
  %1433 = vmatpush.xpose.msra.mxu0 %v1367
  %1434 = vmatpush.xpose.msra.mxu0 %v1364
  %1435 = vmatpush.xpose.msra.mxu0 %v1361
  %1436 = vmatpush.xpose.msra.mxu0 %v1358
  %1437 = vmatpush.xpose.msra.mxu0 %v1355
  %1438 = vmatpush.xpose.msra.mxu0 %v1352
  %1439 = vmatpush.xpose.msra.mxu0 %v1349
  %1440 = vmatpush.xpose.msra.mxu0 %v1346
  %1441 = vmatpush.xpose.msra.mxu0 %v1343
  %1442 = vmatpush.xpose.msra.mxu0 %v1340
  %1443 = vmatpush.xpose.msra.mxu0 %v1337
  %1444 = vmatpush.xpose.msra.mxu0 %v1334
  %1445 = vmatmul.f32.gmra.mxu0 %v1331
  %v1446 = vpop.f32.mrf.mxu0
  %v1447 = vadd.f32 0.0, %v1446
  %1448 = vdwg.mxu0
  %1449 = vmatpush.xpose.msra.mxu0 %v1427
  %1450 = vmatpush.xpose.msra.mxu0 %v1424
  %1451 = vmatpush.xpose.msra.mxu0 %v1421
  %1452 = vmatpush.xpose.msra.mxu0 %v1418
  %1453 = vmatpush.xpose.msra.mxu0 %v1415
  %1454 = vmatpush.xpose.msra.mxu0 %v1412
  %1455 = vmatpush.xpose.msra.mxu0 %v1409
  %1456 = vmatpush.xpose.msra.mxu0 %v1406
  %1457 = vmatpush.xpose.msra.mxu0 %v1403
  %1458 = vmatpush.xpose.msra.mxu0 %v1400
  %1459 = vmatpush.xpose.msra.mxu0 %v1397
  %1460 = vmatpush.xpose.msra.mxu0 %v1394
  %1461 = vmatpush.xpose.msra.mxu0 %v1391
  %1462 = vmatpush.xpose.msra.mxu0 %v1388
  %1463 = vmatpush.xpose.msra.mxu0 %v1385
  %1464 = vmatpush.xpose.msra.mxu0 %v1382
  %1465 = vmatmul.f32.gmra.mxu0 %v1331
  %v1466 = vpop.f32.mrf.mxu0
  %v1467 = vadd.f32 0.0, %v1466
  %1468 = vdwg.mxu0
  %v1469 = vadd.f32 %v1296, %v1447
  %v1470 = vadd.f32 %v1297, %v1467
  %v1471 = vld [vmem:[%s559 + $0x2] sm:$0xff]
  %v1472 = vld [vmem:[%s559 + $0x12] sm:$0xff]
  %v1473 = vld [vmem:[%s559 + $0x22] sm:$0xff]
  %v1474 = vld [vmem:[%s559 + $0x32] sm:$0xff]
  %v1475 = vld [vmem:[%s559 + $0x42] sm:$0xff]
  %v1476 = vld [vmem:[%s559 + $0x52] sm:$0xff]
  %v1477 = vld [vmem:[%s559 + $0x62] sm:$0xff]
  %v1478 = vld [vmem:[%s559 + $0x72] sm:$0xff]
  %v1479 = vld [vmem:[%s559 + $0xa2] sm:$0xff]
  %v1480 = vld [vmem:[%s559 + $0xb2] sm:$0xff]
  %v1481 = vld [vmem:[%s559 + $0xc2] sm:$0xff]
  %v1482 = vld [vmem:[%s559 + $0xd2] sm:$0xff]
  %v1483 = vld [vmem:[%s559 + $0xe2] sm:$0xff]
  %v1484 = vld [vmem:[%s559 + $0xf2] sm:$0xff]
  %v1485 = vld [vmem:[%s559 + $0x102] sm:$0xff]
  %v1486 = vld [vmem:[%s559 + $0x112] sm:$0xff]
  %v1487 = vld [vmem:[%s559 + $0x142] sm:$0xff]
  %v1488 = vld [vmem:[%s559 + $0x152] sm:$0xff]
  %v1489 = vld [vmem:[%s559 + $0x162] sm:$0xff]
  %v1490 = vld [vmem:[%s559 + $0x172] sm:$0xff]
  %v1491 = vld [vmem:[%s559 + $0x182] sm:$0xff]
  %v1492 = vld [vmem:[%s559 + $0x192] sm:$0xff]
  %v1493 = vld [vmem:[%s559 + $0x1a2] sm:$0xff]
  %v1494 = vld [vmem:[%s559 + $0x1b2] sm:$0xff]
  %v1495 = vld [vmem:[%s559 + $0x1e2] sm:$0xff]
  %v1496 = vld [vmem:[%s559 + $0x1f2] sm:$0xff]
  %v1497 = vld [vmem:[%s559 + $0x202] sm:$0xff]
  %v1498 = vld [vmem:[%s559 + $0x212] sm:$0xff]
  %v1499 = vld [vmem:[%s559 + $0x222] sm:$0xff]
  %v1500 = vld [vmem:[%s559 + $0x232] sm:$0xff]
  %v1501 = vld [vmem:[%s559 + $0x242] sm:$0xff]
  %v1502 = vld [vmem:[%s559 + $0x252] sm:$0xff]
  %v1504 = vsel %vm441, %v606, 0
  %v1507 = vsel %vm441, %v1471, 0
  %v1510 = vsel %vm441, %v1472, 0
  %v1513 = vsel %vm441, %v1473, 0
  %v1516 = vsel %vm441, %v1474, 0
  %v1519 = vsel %vm441, %v1475, 0
  %v1522 = vsel %vm441, %v1476, 0
  %v1525 = vsel %vm441, %v1477, 0
  %v1528 = vsel %vm441, %v1478, 0
  %v1531 = vsel %vm441, %v1479, 0
  %v1534 = vsel %vm441, %v1480, 0
  %v1537 = vsel %vm441, %v1481, 0
  %v1540 = vsel %vm441, %v1482, 0
  %v1543 = vsel %vm441, %v1483, 0
  %v1546 = vsel %vm441, %v1484, 0
  %v1549 = vsel %vm441, %v1485, 0
  %v1552 = vsel %vm441, %v1486, 0
  %v1555 = vsel %vm441, %v1487, 0
  %v1558 = vsel %vm441, %v1488, 0
  %v1561 = vsel %vm441, %v1489, 0
  %v1564 = vsel %vm441, %v1490, 0
  %v1567 = vsel %vm441, %v1491, 0
  %v1570 = vsel %vm441, %v1492, 0
  %v1573 = vsel %vm441, %v1493, 0
  %v1576 = vsel %vm441, %v1494, 0
  %v1579 = vsel %vm441, %v1495, 0
  %v1582 = vsel %vm441, %v1496, 0
  %v1585 = vsel %vm441, %v1497, 0
  %v1588 = vsel %vm441, %v1498, 0
  %v1591 = vsel %vm441, %v1499, 0
  %v1594 = vsel %vm441, %v1500, 0
  %v1597 = vsel %vm441, %v1501, 0
  %v1600 = vsel %vm441, %v1502, 0
  %1602 = vmatpush.xpose.msra.mxu0 %v1552
  %1603 = vmatpush.xpose.msra.mxu0 %v1549
  %1604 = vmatpush.xpose.msra.mxu0 %v1546
  %1605 = vmatpush.xpose.msra.mxu0 %v1543
  %1606 = vmatpush.xpose.msra.mxu0 %v1540
  %1607 = vmatpush.xpose.msra.mxu0 %v1537
  %1608 = vmatpush.xpose.msra.mxu0 %v1534
  %1609 = vmatpush.xpose.msra.mxu0 %v1531
  %1610 = vmatpush.xpose.msra.mxu0 %v1528
  %1611 = vmatpush.xpose.msra.mxu0 %v1525
  %1612 = vmatpush.xpose.msra.mxu0 %v1522
  %1613 = vmatpush.xpose.msra.mxu0 %v1519
  %1614 = vmatpush.xpose.msra.mxu0 %v1516
  %1615 = vmatpush.xpose.msra.mxu0 %v1513
  %1616 = vmatpush.xpose.msra.mxu0 %v1510
  %1617 = vmatpush.xpose.msra.mxu0 %v1507
  %1618 = vmatmul.f32.gmra.mxu0 %v1504
  %v1619 = vpop.f32.mrf.mxu0
  %v1620 = vadd.f32 0.0, %v1619
  %1621 = vdwg.mxu0
  %1622 = vmatpush.xpose.msra.mxu0 %v1600
  %1623 = vmatpush.xpose.msra.mxu0 %v1597
  %1624 = vmatpush.xpose.msra.mxu0 %v1594
  %1625 = vmatpush.xpose.msra.mxu0 %v1591
  %1626 = vmatpush.xpose.msra.mxu0 %v1588
  %1627 = vmatpush.xpose.msra.mxu0 %v1585
  %1628 = vmatpush.xpose.msra.mxu0 %v1582
  %1629 = vmatpush.xpose.msra.mxu0 %v1579
  %1630 = vmatpush.xpose.msra.mxu0 %v1576
  %1631 = vmatpush.xpose.msra.mxu0 %v1573
  %1632 = vmatpush.xpose.msra.mxu0 %v1570
  %1633 = vmatpush.xpose.msra.mxu0 %v1567
  %1634 = vmatpush.xpose.msra.mxu0 %v1564
  %1635 = vmatpush.xpose.msra.mxu0 %v1561
  %1636 = vmatpush.xpose.msra.mxu0 %v1558
  %1637 = vmatpush.xpose.msra.mxu0 %v1555
  %1638 = vmatmul.f32.gmra.mxu0 %v1504
  %v1639 = vpop.f32.mrf.mxu0
  %v1640 = vadd.f32 0.0, %v1639
  %1641 = vdwg.mxu0
  %v1642 = vadd.f32 %v1469, %v1620
  %v1643 = vadd.f32 %v1470, %v1640
  %s1644 = scalar_lea.vmem [#allocation2], 32
  %v1645 = vld [vmem:[%s1644] sm:$0xff]
  %v1646 = vld [vmem:[%s1644 + $0x10] sm:$0xff]
  %v1647 = vld [vmem:[%s1644 + $0x20] sm:$0xff]
  %v1648 = vld [vmem:[%s1644 + $0x30] sm:$0xff]
  %v1649 = vld [vmem:[%s1644 + $0x40] sm:$0xff]
  %v1650 = vld [vmem:[%s1644 + $0x50] sm:$0xff]
  %v1651 = vld [vmem:[%s1644 + $0x60] sm:$0xff]
  %v1652 = vld [vmem:[%s1644 + $0x70] sm:$0xff]
  %v1653 = vld [vmem:[%s1644 + $0xa0] sm:$0xff]
  %v1654 = vld [vmem:[%s1644 + $0xb0] sm:$0xff]
  %v1655 = vld [vmem:[%s1644 + $0xc0] sm:$0xff]
  %v1656 = vld [vmem:[%s1644 + $0xd0] sm:$0xff]
  %v1657 = vld [vmem:[%s1644 + $0xe0] sm:$0xff]
  %v1658 = vld [vmem:[%s1644 + $0xf0] sm:$0xff]
  %v1659 = vld [vmem:[%s1644 + $0x100] sm:$0xff]
  %v1660 = vld [vmem:[%s1644 + $0x110] sm:$0xff]
  %v1661 = vld [vmem:[%s1644 + $0x140] sm:$0xff]
  %v1662 = vld [vmem:[%s1644 + $0x150] sm:$0xff]
  %v1663 = vld [vmem:[%s1644 + $0x160] sm:$0xff]
  %v1664 = vld [vmem:[%s1644 + $0x170] sm:$0xff]
  %v1665 = vld [vmem:[%s1644 + $0x180] sm:$0xff]
  %v1666 = vld [vmem:[%s1644 + $0x190] sm:$0xff]
  %v1667 = vld [vmem:[%s1644 + $0x1a0] sm:$0xff]
  %v1668 = vld [vmem:[%s1644 + $0x1b0] sm:$0xff]
  %v1669 = vld [vmem:[%s1644 + $0x1e0] sm:$0xff]
  %v1670 = vld [vmem:[%s1644 + $0x1f0] sm:$0xff]
  %v1671 = vld [vmem:[%s1644 + $0x200] sm:$0xff]
  %v1672 = vld [vmem:[%s1644 + $0x210] sm:$0xff]
  %v1673 = vld [vmem:[%s1644 + $0x220] sm:$0xff]
  %v1674 = vld [vmem:[%s1644 + $0x230] sm:$0xff]
  %v1675 = vld [vmem:[%s1644 + $0x240] sm:$0xff]
  %v1676 = vld [vmem:[%s1644 + $0x250] sm:$0xff]
  %v1678 = vsel %vm441, %v607, 0
  %v1681 = vsel %vm441, %v1645, 0
  %v1684 = vsel %vm441, %v1646, 0
  %v1687 = vsel %vm441, %v1647, 0
  %v1690 = vsel %vm441, %v1648, 0
  %v1693 = vsel %vm441, %v1649, 0
  %v1696 = vsel %vm441, %v1650, 0
  %v1699 = vsel %vm441, %v1651, 0
  %v1702 = vsel %vm441, %v1652, 0
  %v1705 = vsel %vm441, %v1653, 0
  %v1708 = vsel %vm441, %v1654, 0
  %v1711 = vsel %vm441, %v1655, 0
  %v1714 = vsel %vm441, %v1656, 0
  %v1717 = vsel %vm441, %v1657, 0
  %v1720 = vsel %vm441, %v1658, 0
  %v1723 = vsel %vm441, %v1659, 0
  %v1726 = vsel %vm441, %v1660, 0
  %v1729 = vsel %vm441, %v1661, 0
  %v1732 = vsel %vm441, %v1662, 0
  %v1735 = vsel %vm441, %v1663, 0
  %v1738 = vsel %vm441, %v1664, 0
  %v1741 = vsel %vm441, %v1665, 0
  %v1744 = vsel %vm441, %v1666, 0
  %v1747 = vsel %vm441, %v1667, 0
  %v1750 = vsel %vm441, %v1668, 0
  %v1753 = vsel %vm441, %v1669, 0
  %v1756 = vsel %vm441, %v1670, 0
  %v1759 = vsel %vm441, %v1671, 0
  %v1762 = vsel %vm441, %v1672, 0
  %v1765 = vsel %vm441, %v1673, 0
  %v1768 = vsel %vm441, %v1674, 0
  %v1771 = vsel %vm441, %v1675, 0
  %v1774 = vsel %vm441, %v1676, 0
  %1776 = vmatpush.xpose.msra.mxu0 %v1726
  %1777 = vmatpush.xpose.msra.mxu0 %v1723
  %1778 = vmatpush.xpose.msra.mxu0 %v1720
  %1779 = vmatpush.xpose.msra.mxu0 %v1717
  %1780 = vmatpush.xpose.msra.mxu0 %v1714
  %1781 = vmatpush.xpose.msra.mxu0 %v1711
  %1782 = vmatpush.xpose.msra.mxu0 %v1708
  %1783 = vmatpush.xpose.msra.mxu0 %v1705
  %1784 = vmatpush.xpose.msra.mxu0 %v1702
  %1785 = vmatpush.xpose.msra.mxu0 %v1699
  %1786 = vmatpush.xpose.msra.mxu0 %v1696
  %1787 = vmatpush.xpose.msra.mxu0 %v1693
  %1788 = vmatpush.xpose.msra.mxu0 %v1690
  %1789 = vmatpush.xpose.msra.mxu0 %v1687
  %1790 = vmatpush.xpose.msra.mxu0 %v1684
  %1791 = vmatpush.xpose.msra.mxu0 %v1681
  %1792 = vmatmul.f32.gmra.mxu0 %v1678
  %v1793 = vpop.f32.mrf.mxu0
  %v1794 = vadd.f32 0.0, %v1793
  %1795 = vdwg.mxu0
  %1796 = vmatpush.xpose.msra.mxu0 %v1774
  %1797 = vmatpush.xpose.msra.mxu0 %v1771
  %1798 = vmatpush.xpose.msra.mxu0 %v1768
  %1799 = vmatpush.xpose.msra.mxu0 %v1765
  %1800 = vmatpush.xpose.msra.mxu0 %v1762
  %1801 = vmatpush.xpose.msra.mxu0 %v1759
  %1802 = vmatpush.xpose.msra.mxu0 %v1756
  %1803 = vmatpush.xpose.msra.mxu0 %v1753
  %1804 = vmatpush.xpose.msra.mxu0 %v1750
  %1805 = vmatpush.xpose.msra.mxu0 %v1747
  %1806 = vmatpush.xpose.msra.mxu0 %v1744
  %1807 = vmatpush.xpose.msra.mxu0 %v1741
  %1808 = vmatpush.xpose.msra.mxu0 %v1738
  %1809 = vmatpush.xpose.msra.mxu0 %v1735
  %1810 = vmatpush.xpose.msra.mxu0 %v1732
  %1811 = vmatpush.xpose.msra.mxu0 %v1729
  %1812 = vmatmul.f32.gmra.mxu0 %v1678
  %v1813 = vpop.f32.mrf.mxu0
  %v1814 = vadd.f32 0.0, %v1813
  %1815 = vdwg.mxu0
  %v1816 = vadd.f32 %v1642, %v1794
  %v1817 = vadd.f32 %v1643, %v1814
  %v1818 = vld [vmem:[%s1644 + $0x1] sm:$0xff]
  %v1819 = vld [vmem:[%s1644 + $0x11] sm:$0xff]
  %v1820 = vld [vmem:[%s1644 + $0x21] sm:$0xff]
  %v1821 = vld [vmem:[%s1644 + $0x31] sm:$0xff]
  %v1822 = vld [vmem:[%s1644 + $0x41] sm:$0xff]
  %v1823 = vld [vmem:[%s1644 + $0x51] sm:$0xff]
  %v1824 = vld [vmem:[%s1644 + $0x61] sm:$0xff]
  %v1825 = vld [vmem:[%s1644 + $0x71] sm:$0xff]
  %v1826 = vld [vmem:[%s1644 + $0xa1] sm:$0xff]
  %v1827 = vld [vmem:[%s1644 + $0xb1] sm:$0xff]
  %v1828 = vld [vmem:[%s1644 + $0xc1] sm:$0xff]
  %v1829 = vld [vmem:[%s1644 + $0xd1] sm:$0xff]
  %v1830 = vld [vmem:[%s1644 + $0xe1] sm:$0xff]
  %v1831 = vld [vmem:[%s1644 + $0xf1] sm:$0xff]
  %v1832 = vld [vmem:[%s1644 + $0x101] sm:$0xff]
  %v1833 = vld [vmem:[%s1644 + $0x111] sm:$0xff]
  %v1834 = vld [vmem:[%s1644 + $0x141] sm:$0xff]
  %v1835 = vld [vmem:[%s1644 + $0x151] sm:$0xff]
  %v1836 = vld [vmem:[%s1644 + $0x161] sm:$0xff]
  %v1837 = vld [vmem:[%s1644 + $0x171] sm:$0xff]
  %v1838 = vld [vmem:[%s1644 + $0x181] sm:$0xff]
  %v1839 = vld [vmem:[%s1644 + $0x191] sm:$0xff]
  %v1840 = vld [vmem:[%s1644 + $0x1a1] sm:$0xff]
  %v1841 = vld [vmem:[%s1644 + $0x1b1] sm:$0xff]
  %v1842 = vld [vmem:[%s1644 + $0x1e1] sm:$0xff]
  %v1843 = vld [vmem:[%s1644 + $0x1f1] sm:$0xff]
  %v1844 = vld [vmem:[%s1644 + $0x201] sm:$0xff]
  %v1845 = vld [vmem:[%s1644 + $0x211] sm:$0xff]
  %v1846 = vld [vmem:[%s1644 + $0x221] sm:$0xff]
  %v1847 = vld [vmem:[%s1644 + $0x231] sm:$0xff]
  %v1848 = vld [vmem:[%s1644 + $0x241] sm:$0xff]
  %v1849 = vld [vmem:[%s1644 + $0x251] sm:$0xff]
  %v1851 = vsel %vm441, %v608, 0
  %v1854 = vsel %vm441, %v1818, 0
  %v1857 = vsel %vm441, %v1819, 0
  %v1860 = vsel %vm441, %v1820, 0
  %v1863 = vsel %vm441, %v1821, 0
  %v1866 = vsel %vm441, %v1822, 0
  %v1869 = vsel %vm441, %v1823, 0
  %v1872 = vsel %vm441, %v1824, 0
  %v1875 = vsel %vm441, %v1825, 0
  %v1878 = vsel %vm441, %v1826, 0
  %v1881 = vsel %vm441, %v1827, 0
  %v1884 = vsel %vm441, %v1828, 0
  %v1887 = vsel %vm441, %v1829, 0
  %v1890 = vsel %vm441, %v1830, 0
  %v1893 = vsel %vm441, %v1831, 0
  %v1896 = vsel %vm441, %v1832, 0
  %v1899 = vsel %vm441, %v1833, 0
  %v1902 = vsel %vm441, %v1834, 0
  %v1905 = vsel %vm441, %v1835, 0
  %v1908 = vsel %vm441, %v1836, 0
  %v1911 = vsel %vm441, %v1837, 0
  %v1914 = vsel %vm441, %v1838, 0
  %v1917 = vsel %vm441, %v1839, 0
  %v1920 = vsel %vm441, %v1840, 0
  %v1923 = vsel %vm441, %v1841, 0
  %v1926 = vsel %vm441, %v1842, 0
  %v1929 = vsel %vm441, %v1843, 0
  %v1932 = vsel %vm441, %v1844, 0
  %v1935 = vsel %vm441, %v1845, 0
  %v1938 = vsel %vm441, %v1846, 0
  %v1941 = vsel %vm441, %v1847, 0
  %v1944 = vsel %vm441, %v1848, 0
  %v1947 = vsel %vm441, %v1849, 0
  %1949 = vmatpush.xpose.msra.mxu0 %v1899
  %1950 = vmatpush.xpose.msra.mxu0 %v1896
  %1951 = vmatpush.xpose.msra.mxu0 %v1893
  %1952 = vmatpush.xpose.msra.mxu0 %v1890
  %1953 = vmatpush.xpose.msra.mxu0 %v1887
  %1954 = vmatpush.xpose.msra.mxu0 %v1884
  %1955 = vmatpush.xpose.msra.mxu0 %v1881
  %1956 = vmatpush.xpose.msra.mxu0 %v1878
  %1957 = vmatpush.xpose.msra.mxu0 %v1875
  %1958 = vmatpush.xpose.msra.mxu0 %v1872
  %1959 = vmatpush.xpose.msra.mxu0 %v1869
  %1960 = vmatpush.xpose.msra.mxu0 %v1866
  %1961 = vmatpush.xpose.msra.mxu0 %v1863
  %1962 = vmatpush.xpose.msra.mxu0 %v1860
  %1963 = vmatpush.xpose.msra.mxu0 %v1857
  %1964 = vmatpush.xpose.msra.mxu0 %v1854
  %1965 = vmatmul.f32.gmra.mxu0 %v1851
  %v1966 = vpop.f32.mrf.mxu0
  %v1967 = vadd.f32 0.0, %v1966
  %1968 = vdwg.mxu0
  %1969 = vmatpush.xpose.msra.mxu0 %v1947
  %1970 = vmatpush.xpose.msra.mxu0 %v1944
  %1971 = vmatpush.xpose.msra.mxu0 %v1941
  %1972 = vmatpush.xpose.msra.mxu0 %v1938
  %1973 = vmatpush.xpose.msra.mxu0 %v1935
  %1974 = vmatpush.xpose.msra.mxu0 %v1932
  %1975 = vmatpush.xpose.msra.mxu0 %v1929
  %1976 = vmatpush.xpose.msra.mxu0 %v1926
  %1977 = vmatpush.xpose.msra.mxu0 %v1923
  %1978 = vmatpush.xpose.msra.mxu0 %v1920
  %1979 = vmatpush.xpose.msra.mxu0 %v1917
  %1980 = vmatpush.xpose.msra.mxu0 %v1914
  %1981 = vmatpush.xpose.msra.mxu0 %v1911
  %1982 = vmatpush.xpose.msra.mxu0 %v1908
  %1983 = vmatpush.xpose.msra.mxu0 %v1905
  %1984 = vmatpush.xpose.msra.mxu0 %v1902
  %1985 = vmatmul.f32.gmra.mxu0 %v1851
  %v1986 = vpop.f32.mrf.mxu0
  %v1987 = vadd.f32 0.0, %v1986
  %1988 = vdwg.mxu0
  %v1989 = vadd.f32 %v1816, %v1967
  %v1990 = vadd.f32 %v1817, %v1987
  %v1991 = vld [vmem:[%s1644 + $0x2] sm:$0xff]
  %v1992 = vld [vmem:[%s1644 + $0x12] sm:$0xff]
  %v1993 = vld [vmem:[%s1644 + $0x22] sm:$0xff]
  %v1994 = vld [vmem:[%s1644 + $0x32] sm:$0xff]
  %v1995 = vld [vmem:[%s1644 + $0x42] sm:$0xff]
  %v1996 = vld [vmem:[%s1644 + $0x52] sm:$0xff]
  %v1997 = vld [vmem:[%s1644 + $0x62] sm:$0xff]
  %v1998 = vld [vmem:[%s1644 + $0x72] sm:$0xff]
  %v1999 = vld [vmem:[%s1644 + $0xa2] sm:$0xff]
  %v2000 = vld [vmem:[%s1644 + $0xb2] sm:$0xff]
  %v2001 = vld [vmem:[%s1644 + $0xc2] sm:$0xff]
  %v2002 = vld [vmem:[%s1644 + $0xd2] sm:$0xff]
  %v2003 = vld [vmem:[%s1644 + $0xe2] sm:$0xff]
  %v2004 = vld [vmem:[%s1644 + $0xf2] sm:$0xff]
  %v2005 = vld [vmem:[%s1644 + $0x102] sm:$0xff]
  %v2006 = vld [vmem:[%s1644 + $0x112] sm:$0xff]
  %v2007 = vld [vmem:[%s1644 + $0x142] sm:$0xff]
  %v2008 = vld [vmem:[%s1644 + $0x152] sm:$0xff]
  %v2009 = vld [vmem:[%s1644 + $0x162] sm:$0xff]
  %v2010 = vld [vmem:[%s1644 + $0x172] sm:$0xff]
  %v2011 = vld [vmem:[%s1644 + $0x182] sm:$0xff]
  %v2012 = vld [vmem:[%s1644 + $0x192] sm:$0xff]
  %v2013 = vld [vmem:[%s1644 + $0x1a2] sm:$0xff]
  %v2014 = vld [vmem:[%s1644 + $0x1b2] sm:$0xff]
  %v2015 = vld [vmem:[%s1644 + $0x1e2] sm:$0xff]
  %v2016 = vld [vmem:[%s1644 + $0x1f2] sm:$0xff]
  %v2017 = vld [vmem:[%s1644 + $0x202] sm:$0xff]
  %v2018 = vld [vmem:[%s1644 + $0x212] sm:$0xff]
  %v2019 = vld [vmem:[%s1644 + $0x222] sm:$0xff]
  %v2020 = vld [vmem:[%s1644 + $0x232] sm:$0xff]
  %v2021 = vld [vmem:[%s1644 + $0x242] sm:$0xff]
  %v2022 = vld [vmem:[%s1644 + $0x252] sm:$0xff]
  %v2024 = vsel %vm441, %v609, 0
  %v2027 = vsel %vm441, %v1991, 0
  %v2030 = vsel %vm441, %v1992, 0
  %v2033 = vsel %vm441, %v1993, 0
  %v2036 = vsel %vm441, %v1994, 0
  %v2039 = vsel %vm441, %v1995, 0
  %v2042 = vsel %vm441, %v1996, 0
  %v2045 = vsel %vm441, %v1997, 0
  %v2048 = vsel %vm441, %v1998, 0
  %v2051 = vsel %vm441, %v1999, 0
  %v2054 = vsel %vm441, %v2000, 0
  %v2057 = vsel %vm441, %v2001, 0
  %v2060 = vsel %vm441, %v2002, 0
  %v2063 = vsel %vm441, %v2003, 0
  %v2066 = vsel %vm441, %v2004, 0
  %v2069 = vsel %vm441, %v2005, 0
  %v2072 = vsel %vm441, %v2006, 0
  %v2075 = vsel %vm441, %v2007, 0
  %v2078 = vsel %vm441, %v2008, 0
  %v2081 = vsel %vm441, %v2009, 0
  %v2084 = vsel %vm441, %v2010, 0
  %v2087 = vsel %vm441, %v2011, 0
  %v2090 = vsel %vm441, %v2012, 0
  %v2093 = vsel %vm441, %v2013, 0
  %v2096 = vsel %vm441, %v2014, 0
  %v2099 = vsel %vm441, %v2015, 0
  %v2102 = vsel %vm441, %v2016, 0
  %v2105 = vsel %vm441, %v2017, 0
  %v2108 = vsel %vm441, %v2018, 0
  %v2111 = vsel %vm441, %v2019, 0
  %v2114 = vsel %vm441, %v2020, 0
  %v2117 = vsel %vm441, %v2021, 0
  %v2120 = vsel %vm441, %v2022, 0
  %2122 = vmatpush.xpose.msra.mxu0 %v2072
  %2123 = vmatpush.xpose.msra.mxu0 %v2069
  %2124 = vmatpush.xpose.msra.mxu0 %v2066
  %2125 = vmatpush.xpose.msra.mxu0 %v2063
  %2126 = vmatpush.xpose.msra.mxu0 %v2060
  %2127 = vmatpush.xpose.msra.mxu0 %v2057
  %2128 = vmatpush.xpose.msra.mxu0 %v2054
  %2129 = vmatpush.xpose.msra.mxu0 %v2051
  %2130 = vmatpush.xpose.msra.mxu0 %v2048
  %2131 = vmatpush.xpose.msra.mxu0 %v2045
  %2132 = vmatpush.xpose.msra.mxu0 %v2042
  %2133 = vmatpush.xpose.msra.mxu0 %v2039
  %2134 = vmatpush.xpose.msra.mxu0 %v2036
  %2135 = vmatpush.xpose.msra.mxu0 %v2033
  %2136 = vmatpush.xpose.msra.mxu0 %v2030
  %2137 = vmatpush.xpose.msra.mxu0 %v2027
  %2138 = vmatmul.f32.gmra.mxu0 %v2024
  %v2139 = vpop.f32.mrf.mxu0
  %v2140 = vadd.f32 0.0, %v2139
  %2141 = vdwg.mxu0
  %2142 = vmatpush.xpose.msra.mxu0 %v2120
  %2143 = vmatpush.xpose.msra.mxu0 %v2117
  %2144 = vmatpush.xpose.msra.mxu0 %v2114
  %2145 = vmatpush.xpose.msra.mxu0 %v2111
  %2146 = vmatpush.xpose.msra.mxu0 %v2108
  %2147 = vmatpush.xpose.msra.mxu0 %v2105
  %2148 = vmatpush.xpose.msra.mxu0 %v2102
  %2149 = vmatpush.xpose.msra.mxu0 %v2099
  %2150 = vmatpush.xpose.msra.mxu0 %v2096
  %2151 = vmatpush.xpose.msra.mxu0 %v2093
  %2152 = vmatpush.xpose.msra.mxu0 %v2090
  %2153 = vmatpush.xpose.msra.mxu0 %v2087
  %2154 = vmatpush.xpose.msra.mxu0 %v2084
  %2155 = vmatpush.xpose.msra.mxu0 %v2081
  %2156 = vmatpush.xpose.msra.mxu0 %v2078
  %2157 = vmatpush.xpose.msra.mxu0 %v2075
  %2158 = vmatmul.f32.gmra.mxu0 %v2024
  %v2159 = vpop.f32.mrf.mxu0
  %v2160 = vadd.f32 0.0, %v2159
  %2161 = vdwg.mxu0
  %v2162 = vadd.f32 %v1989, %v2140
  %v2163 = vadd.f32 %v1990, %v2160
  %v2164 = vld [vmem:[%s2] sm:$0xf]
  %2166 = vset.pattern.permute.xlu0 0
  %2167 = vperm.xlu0 %2166, %v2164
  %v2168 = vpop.permute.xlu0 %2167
  %v2170 = vadd.f32 %v2162, %v2168
  %v2171 = vadd.f32 %v2163, %v2168
  %vm2172 = vcmp.ge.f32.partialorder %v2170, 0.0
  %vm2173 = vcmp.ge.f32.partialorder %v2171, 0.0
  %v2174 = vmul.f32 %v2170, 0.2
  %v2175 = vmul.f32 %v2171, 0.2
  %v2176 = vsel %vm2172, %v2170, %v2174
  %v2177 = vsel %vm2173, %v2171, %v2175
  %v2178 = vmul.f32 %v2176, 1.4142135
  %v2179 = vmul.f32 %v2177, 1.4142135
  %v2181 = vrot.slane %v2178, 1
  %v2182 = vrot.slane %v2178, 2
  %v2183 = vrot.slane %v2178, 3
  %vm2187 = vcmask 516096
  %2188 = vst.msk [vmem:[%s7] sm:$0x1] %vm2187, %v2178
  %2189 = vst.msk [vmem:[%s7 + $0x4] sm:$0x1] %vm2187, %v2181
  %2190 = vst.msk [vmem:[%s7 + $0x8] sm:$0x1] %vm2187, %v2182
  %2191 = vst.msk [vmem:[%s7 + $0xc] sm:$0x1] %vm2187, %v2183
  %v2192 = vperm.slane %v2178, 0
  %v2193 = vperm.slane %v2181, 0
  %v2194 = vperm.slane %v2182, 0
  %v2195 = vperm.slane %v2183, 0
  %2196 = vrot.lane.b32.xlu0 %v2192, 64
  %v2197 = vpop.permute.xlu0 %2196
  %2198 = vrot.lane.b32.xlu0 %v2193, 64
  %v2199 = vpop.permute.xlu0 %2198
  %2200 = vrot.lane.b32.xlu0 %v2194, 64
  %v2201 = vpop.permute.xlu0 %2200
  %2202 = vrot.lane.b32.xlu0 %v2195, 64
  %v2203 = vpop.permute.xlu0 %2202
  %2208 = vst.msk [vmem:[%s7 + $0x1] sm:$0x1] %vm2187, %v2197
  %2209 = vst.msk [vmem:[%s7 + $0x5] sm:$0x1] %vm2187, %v2199
  %2210 = vst.msk [vmem:[%s7 + $0x9] sm:$0x1] %vm2187, %v2201
  %2211 = vst.msk [vmem:[%s7 + $0xd] sm:$0x1] %vm2187, %v2203
  %v2213 = vrot.slane %v2179, 1
  %v2214 = vrot.slane %v2179, 2
  %v2215 = vrot.slane %v2179, 3
  %2219 = vst.msk [vmem:[%s7 + $0x2] sm:$0x1] %vm2187, %v2179
  %2220 = vst.msk [vmem:[%s7 + $0x6] sm:$0x1] %vm2187, %v2213
  %2221 = vst.msk [vmem:[%s7 + $0xa] sm:$0x1] %vm2187, %v2214
  %2222 = vst.msk [vmem:[%s7 + $0xe] sm:$0x1] %vm2187, %v2215
  %v2223 = vperm.slane %v2179, 0
  %v2224 = vperm.slane %v2213, 0
  %v2225 = vperm.slane %v2214, 0
  %v2226 = vperm.slane %v2215, 0
  %2227 = vrot.lane.b32.xlu0 %v2223, 64
  %v2228 = vpop.permute.xlu0 %2227
  %2229 = vrot.lane.b32.xlu0 %v2224, 64
  %v2230 = vpop.permute.xlu0 %2229
  %2231 = vrot.lane.b32.xlu0 %v2225, 64
  %v2232 = vpop.permute.xlu0 %2231
  %2233 = vrot.lane.b32.xlu0 %v2226, 64
  %v2234 = vpop.permute.xlu0 %2233
  %2239 = vst.msk [vmem:[%s7 + $0x3] sm:$0x1] %vm2187, %v2228
  %2240 = vst.msk [vmem:[%s7 + $0x7] sm:$0x1] %vm2187, %v2230
  %2241 = vst.msk [vmem:[%s7 + $0xb] sm:$0x1] %vm2187, %v2232
  %2242 = vst.msk [vmem:[%s7 + $0xf] sm:$0x1] %vm2187, %v2234
  %v2243 = vld [vmem:[%s7] sm:$0xf]
  %v2244 = vld [vmem:[%s3] sm:$0xff]
  %v2245 = vld [vmem:[%s3 + $0x8] sm:$0xff]
  %v2246 = vld [vmem:[%s3 + $0x10] sm:$0xff]
  %v2247 = vld [vmem:[%s3 + $0x18] sm:$0xff]
  %v2248 = vld [vmem:[%s3 + $0x20] sm:$0xff]
  %v2249 = vld [vmem:[%s3 + $0x28] sm:$0xff]
  %v2250 = vld [vmem:[%s3 + $0x30] sm:$0xff]
  %v2251 = vld [vmem:[%s3 + $0x38] sm:$0xff]
  %s2252 = scalar_lea.vmem %s7, 4
  %v2253 = vld [vmem:[%s2252] sm:$0xf]
  %s2254 = scalar_lea.vmem %s3, 64
  %v2255 = vld [vmem:[%s2254] sm:$0xff]
  %v2256 = vld [vmem:[%s2254 + $0x8] sm:$0xff]
  %v2257 = vld [vmem:[%s2254 + $0x10] sm:$0xff]
  %v2258 = vld [vmem:[%s2254 + $0x18] sm:$0xff]
  %v2259 = vld [vmem:[%s2254 + $0x20] sm:$0xff]
  %v2260 = vld [vmem:[%s2254 + $0x28] sm:$0xff]
  %v2261 = vld [vmem:[%s2254 + $0x30] sm:$0xff]
  %v2262 = vld [vmem:[%s2254 + $0x38] sm:$0xff]
  %vm2263 = vcmask 523264
  %v2265 = vsel %vm2263, %v2253, 0
  %2267 = vmatpush.msra.mxu0 0.0
  %2268 = vmatpush.msra.mxu0 0.0
  %2269 = vmatpush.msra.mxu0 0.0
  %2270 = vmatpush.msra.mxu0 0.0
  %2271 = vmatpush.msra.mxu0 0.0
  %2272 = vmatpush.msra.mxu0 0.0
  %2273 = vmatpush.msra.mxu0 0.0
  %2274 = vmatpush.msra.mxu0 0.0
  %2275 = vmatpush.msra.mxu0 %v2262
  %2276 = vmatpush.msra.mxu0 %v2261
  %2277 = vmatpush.msra.mxu0 %v2260
  %2278 = vmatpush.msra.mxu0 %v2259
  %2279 = vmatpush.msra.mxu0 %v2258
  %2280 = vmatpush.msra.mxu0 %v2257
  %2281 = vmatpush.msra.mxu0 %v2256
  %2282 = vmatpush.msra.mxu0 %v2255
  %2283 = vmatmul.f32.gmra.mxu0 %v2265
  %v2284 = vpop.f32.mrf.mxu0
  %v2285 = vadd.f32 0.0, %v2284
  %2286 = vdwg.mxu0
  %v2288 = vsel %vm2263, %v2243, 0
  %2290 = vmatpush.msra.mxu0 0.0
  %2291 = vmatpush.msra.mxu0 0.0
  %2292 = vmatpush.msra.mxu0 0.0
  %2293 = vmatpush.msra.mxu0 0.0
  %2294 = vmatpush.msra.mxu0 0.0
  %2295 = vmatpush.msra.mxu0 0.0
  %2296 = vmatpush.msra.mxu0 0.0
  %2297 = vmatpush.msra.mxu0 0.0
  %2298 = vmatpush.msra.mxu0 %v2251
  %2299 = vmatpush.msra.mxu0 %v2250
  %2300 = vmatpush.msra.mxu0 %v2249
  %2301 = vmatpush.msra.mxu0 %v2248
  %2302 = vmatpush.msra.mxu0 %v2247
  %2303 = vmatpush.msra.mxu0 %v2246
  %2304 = vmatpush.msra.mxu0 %v2245
  %2305 = vmatpush.msra.mxu0 %v2244
  %2306 = vmatmul.f32.gmra.mxu0 %v2288
  %v2307 = vpop.f32.mrf.mxu0
  %v2308 = vadd.f32 %v2285, %v2307
  %2309 = vdwg.mxu0
  %s2310 = scalar_lea.vmem %s7, 8
  %v2311 = vld [vmem:[%s2310] sm:$0xf]
  %s2312 = scalar_lea.vmem %s3, 128
  %v2313 = vld [vmem:[%s2312] sm:$0xff]
  %v2314 = vld [vmem:[%s2312 + $0x8] sm:$0xff]
  %v2315 = vld [vmem:[%s2312 + $0x10] sm:$0xff]
  %v2316 = vld [vmem:[%s2312 + $0x18] sm:$0xff]
  %v2317 = vld [vmem:[%s2312 + $0x20] sm:$0xff]
  %v2318 = vld [vmem:[%s2312 + $0x28] sm:$0xff]
  %v2319 = vld [vmem:[%s2312 + $0x30] sm:$0xff]
  %v2320 = vld [vmem:[%s2312 + $0x38] sm:$0xff]
  %v2322 = vsel %vm2263, %v2311, 0
  %2324 = vmatpush.msra.mxu0 0.0
  %2325 = vmatpush.msra.mxu0 0.0
  %2326 = vmatpush.msra.mxu0 0.0
  %2327 = vmatpush.msra.mxu0 0.0
  %2328 = vmatpush.msra.mxu0 0.0
  %2329 = vmatpush.msra.mxu0 0.0
  %2330 = vmatpush.msra.mxu0 0.0
  %2331 = vmatpush.msra.mxu0 0.0
  %2332 = vmatpush.msra.mxu0 %v2320
  %2333 = vmatpush.msra.mxu0 %v2319
  %2334 = vmatpush.msra.mxu0 %v2318
  %2335 = vmatpush.msra.mxu0 %v2317
  %2336 = vmatpush.msra.mxu0 %v2316
  %2337 = vmatpush.msra.mxu0 %v2315
  %2338 = vmatpush.msra.mxu0 %v2314
  %2339 = vmatpush.msra.mxu0 %v2313
  %2340 = vmatmul.f32.gmra.mxu0 %v2322
  %v2341 = vpop.f32.mrf.mxu0
  %v2342 = vadd.f32 0.0, %v2341
  %2343 = vdwg.mxu0
  %v2344 = vadd.f32 %v2308, %v2342
  %s2345 = scalar_lea.vmem %s7, 12
  %v2346 = vld [vmem:[%s2345] sm:$0xf]
  %s2347 = scalar_lea.vmem %s3, 192
  %v2348 = vld [vmem:[%s2347] sm:$0xff]
  %v2349 = vld [vmem:[%s2347 + $0x8] sm:$0xff]
  %v2350 = vld [vmem:[%s2347 + $0x10] sm:$0xff]
  %v2351 = vld [vmem:[%s2347 + $0x18] sm:$0xff]
  %v2352 = vld [vmem:[%s2347 + $0x20] sm:$0xff]
  %v2353 = vld [vmem:[%s2347 + $0x28] sm:$0xff]
  %v2354 = vld [vmem:[%s2347 + $0x30] sm:$0xff]
  %v2355 = vld [vmem:[%s2347 + $0x38] sm:$0xff]
  %v2357 = vsel %vm2263, %v2346, 0
  %2359 = vmatpush.msra.mxu0 0.0
  %2360 = vmatpush.msra.mxu0 0.0
  %2361 = vmatpush.msra.mxu0 0.0
  %2362 = vmatpush.msra.mxu0 0.0
  %2363 = vmatpush.msra.mxu0 0.0
  %2364 = vmatpush.msra.mxu0 0.0
  %2365 = vmatpush.msra.mxu0 0.0
  %2366 = vmatpush.msra.mxu0 0.0
  %2367 = vmatpush.msra.mxu0 %v2355
  %2368 = vmatpush.msra.mxu0 %v2354
  %2369 = vmatpush.msra.mxu0 %v2353
  %2370 = vmatpush.msra.mxu0 %v2352
  %2371 = vmatpush.msra.mxu0 %v2351
  %2372 = vmatpush.msra.mxu0 %v2350
  %2373 = vmatpush.msra.mxu0 %v2349
  %2374 = vmatpush.msra.mxu0 %v2348
  %2375 = vmatmul.f32.gmra.mxu0 %v2357
  %v2376 = vpop.f32.mrf.mxu0
  %v2377 = vadd.f32 0.0, %v2376
  %2378 = vdwg.mxu0
  %v2379 = vadd.f32 %v2344, %v2377
  %v2380 = vmul.f32 %v2379, 0.0625
  %v2381 = vld [vmem:[%s4] sm:$0x1]
  %v2383 = vperm.slane %v2381, 0
  %v2385 = vadd.f32 %v2380, %v2383
  %vm2386 = vcmp.ge.f32.partialorder %v2385, 0.0
  %v2387 = vmul.f32 %v2385, 0.2
  %v2388 = vsel %vm2386, %v2385, %v2387
  %v2389 = vmul.f32 %v2388, 1.4142135
  %v2390 = vld [vmem:[%s5] sm:$0xf]
  %v2391 = vmul.f32 %v2389, %v2390
  %vm2392 = vcmask 1043456
  %v2393 = vsel %vm2392, %v2391, 0.0
  %2394 = vadd.xlane.f32.xlu0 %v2393
  %v2395 = vpop.xlane.xlu0 %2394
  %v2396 = vmul.f32 %v2395, 0.25
  %vm2397 = vcmask 3072
  %2398 = vst.msk [vmem:[%s6] sm:$0xf] %vm2397, %v2396
  // Predicated region
  $region26: #{encoder_epilogue_forward.1} parent=0 // pred_check
    _
  $region27: #{encoder_epilogue_forward.1} parent=0 // pred_check_branch
    %2400 = sbr.rel (0) target = $region29
  $region28: #{encoder_epilogue_forward.1} parent=0 // pred_region
    _
  $region29: #{encoder_epilogue_forward.1} parent=0 // pred_fallthru
    _
  // Predicated region
  $region30: #{encoder_epilogue_forward.1} parent=0 // pred_check
    _
  $region31: #{encoder_epilogue_forward.1} parent=0 // pred_check_branch
    %2402 = sbr.rel (0) target = $region33
  $region32: #{encoder_epilogue_forward.1} parent=0 // pred_region
    _
  $region33: #{encoder_epilogue_forward.1} parent=0 // pred_fallthru
    _
  // Predicated region
  $region34: #{encoder_epilogue_forward.1} parent=0 // pred_check
    _
  $region35: #{encoder_epilogue_forward.1} parent=0 // pred_check_branch
    %2404 = sbr.rel (0) target = $region37
  $region36: #{encoder_epilogue_forward.1} parent=0 // pred_region
    _
  $region37: #{encoder_epilogue_forward.1} parent=0 // pred_fallthru
    _
  // Predicated region
  $region38: #{encoder_epilogue_forward.1} parent=0 // pred_check
    _
  $region39: #{encoder_epilogue_forward.1} parent=0 // pred_check_branch
    %2406 = sbr.rel (0) target = $region41
  $region40: #{encoder_epilogue_forward.1} parent=0 // pred_region
    _
  $region41: #{encoder_epilogue_forward.1} parent=0 // pred_fallthru
    _

</llo_original>
